<compile_context>
chip_gen: v7x
topology: tpu7x:2x2x1
jax: 0.10.0
libtpu: 0.0.40
codegen_flags: <defaults>
</compile_context>

<pallas_src>
import numpy as np
import jax
import jax.numpy as jnp
from jax.experimental import pallas as pl
from jax.experimental.pallas import tpu as pltpu

# ------------------------- configuration (small shapes) -----------------------
NFEAT = 8        # m     (in_channels)
NHID = 32        # hidden
NCLASS = 4       # m_y   (out_channels)
LAYERS = 8
NUM_NODE = 16
DROPOUT = 0.5    # module evaluated in eval mode -> dropout is identity


# ------------------------------- host glue ------------------------------------
def chain_edge_index(n):
    """edge_index of an undirected length-n chain graph (models_chains setting)."""
    src = []
    dst = []
    for i in range(n - 1):
        src += [i, i + 1]
        dst += [i + 1, i]
    return np.asarray([src, dst], dtype=np.int64)


def gcn_normalized_adjacency(edge_index, n):
    """Dense A_hat = D^{-1/2} (A + I) D^{-1/2}, the propagation matrix of GCNConv
    (add_self_loops=True, normalize=True)."""
    A = np.zeros((n, n), dtype=np.float64)
    A[edge_index[0], edge_index[1]] = 1.0
    A = A + np.eye(n, dtype=np.float64)                 # self-loops
    d = A.sum(axis=-1)
    d_inv_sqrt = 1.0 / np.sqrt(np.maximum(d, 1e-12))
    return (d_inv_sqrt[:, None] * A * d_inv_sqrt[None, :]).astype(np.float32)


# ------------------------------ Pallas kernel ----------------------------------
def gcn_jknet_kernel(a_ref, x_ref, w0_ref, wr_ref, b_ref, linw_ref, linb_ref, out_ref):
    """Fused: 8 GCN layers + ReLU, JK 'cat', Linear head.

    Per layer l:  H_l = relu(A_hat @ H_{l-1} @ W_l + b_l)
    Head:         out = sum_l H_l @ linW_l + lin_b   (== cat(H_1..H_8) @ lin1.W.T + b)
    """
    a = a_ref[...]                                               # (n, n)

    # ---- layer 0 :  (nfeat -> hidden) ----
    h = jnp.dot(a, x_ref[...], preferred_element_type=jnp.float32)        # (n, nfeat)
    h = jnp.dot(h, w0_ref[...], preferred_element_type=jnp.float32)       # (n, hid)
    h = jnp.maximum(h + b_ref[0:1, :], 0.0)
    # TODO(synk): F.dropout(p=0.5, training=self.training) is stochastic in training
    # mode; implemented as eval-mode identity here.

    acc = jnp.dot(h, linw_ref[0], preferred_element_type=jnp.float32)     # (n, nclass)

    # ---- layers 1 .. LAYERS-1 :  (hidden -> hidden), statically unrolled ----
    for l in range(1, LAYERS):
        h = jnp.dot(a, h, preferred_element_type=jnp.float32)             # (n, hid)
        h = jnp.dot(h, wr_ref[l - 1], preferred_element_type=jnp.float32) # (n, hid)
        h = jnp.maximum(h + b_ref[l:l + 1, :], 0.0)
        acc = acc + jnp.dot(h, linw_ref[l], preferred_element_type=jnp.float32)

    out_ref[...] = acc + linb_ref[...]


# --------------------------------- wrapper -------------------------------------
def gcn_jknet_forward(params, x, a_hat):
    n = x.shape[0]
    nclass = params["lin_b"].shape[-1]
    vmem = pl.BlockSpec(memory_space=pltpu.MemorySpace.VMEM)

    return pl.pallas_call(
        gcn_jknet_kernel,
        in_specs=[vmem] * 7,
        out_specs=vmem,
        out_shape=jax.ShapeDtypeStruct((n, nclass), jnp.float32),
    )(a_hat, x, params["W0"], params["W_rest"], params["b"],
      params["lin_w_t"], params["lin_b"])


# ----------------------------------- main ---------------------------------------
if __name__ == "__main__":
    key = jax.random.PRNGKey(0)
    k_w0, k_wr, k_b, k_lw, k_lb, k_x = jax.random.split(key, 6)

    # GCNConv weights stored pre-transposed: W_l has shape (in, out) so the kernel
    # computes H @ W_l  ==  H @ lin.weight.T (PyG convention).
    glorot0 = float(np.sqrt(6.0 / (NFEAT + NHID)))
    glorot = float(np.sqrt(6.0 / (NHID + NHID)))
    lin_std = 1.0 / float(np.sqrt(LAYERS * NHID))

    lin_w = jax.random.uniform(k_lw, (NCLASS, LAYERS * NHID), jnp.float32,
                               -lin_std, lin_std)                       # nn.Linear weight
    # pre-slice + transpose lin1.weight into per-layer (hidden, nclass) blocks (host glue,
    # hoisted out of the kernel) so the kernel never transposes nor concatenates.
    lin_w_t = jnp.transpose(lin_w.reshape(NCLASS, LAYERS, NHID), (1, 2, 0))  # (L, hid, ncls)

    params = {
        "W0": jax.random.uniform(k_w0, (NFEAT, NHID), jnp.float32, -glorot0, glorot0),
        "W_rest": jax.random.uniform(k_wr, (LAYERS - 1, NHID, NHID), jnp.float32,
                                     -glorot, glorot),
        "b": jnp.zeros((LAYERS, NHID), jnp.float32),                    # GCNConv bias init = 0
        "lin_w_t": lin_w_t,
        "lin_b": jax.random.uniform(k_lb, (1, NCLASS), jnp.float32, -lin_std, lin_std),
    }

    x = jax.random.normal(k_x, (NUM_NODE, NFEAT), jnp.float32)          # node features
    edge_index = chain_edge_index(NUM_NODE)                             # (2, 2*(n-1))
    a_hat = jnp.asarray(gcn_normalized_adjacency(edge_index, NUM_NODE)) # hoisted host glue

    out = gcn_jknet_forward(params, x, a_hat)
    out = jax.block_until_ready(out)
    assert out.shape == (NUM_NODE, NCLASS)
    assert bool(jnp.all(jnp.isfinite(out)))
    print("KERNEL_OK")
</pallas_src>

<mosaic_0001>
module attributes {stable_mosaic.version = 11 : i64} {
  func.func @gcn_jknet_kernel(%arg0: memref<16x16xf32, #tpu.memory_space<vmem>>, %arg1: memref<16x8xf32, #tpu.memory_space<vmem>>, %arg2: memref<8x32xf32, #tpu.memory_space<vmem>>, %arg3: memref<7x32x32xf32, #tpu.memory_space<vmem>>, %arg4: memref<8x32xf32, #tpu.memory_space<vmem>>, %arg5: memref<8x32x4xf32, #tpu.memory_space<vmem>>, %arg6: memref<1x4xf32, #tpu.memory_space<vmem>>, %arg7: memref<16x4xf32, #tpu.memory_space<vmem>>) attributes {dimension_semantics = [], scalar_prefetch = 0 : i64, scratch_operands = 0 : i64, tpu.core_type = #tpu.core_type<tc>} {
    %c0 = arith.constant 0 : index
    %c0_0 = arith.constant 0 : index
    %0 = vector.load %arg0[%c0, %c0_0] : memref<16x16xf32, #tpu.memory_space<vmem>>, vector<16x16xf32>
    %c0_1 = arith.constant 0 : index
    %c0_2 = arith.constant 0 : index
    %1 = vector.load %arg1[%c0_1, %c0_2] : memref<16x8xf32, #tpu.memory_space<vmem>>, vector<16x8xf32>
    %cst = arith.constant dense<0.000000e+00> : vector<16x8xf32>
    %2 = tpu.matmul %0, %1, %cst {dimension_numbers = #tpu.dot_dimension_numbers<[1], [0], [0], [1], [0, 0, 1, 1], [], []>} : vector<16x16xf32>, vector<16x8xf32>, vector<16x8xf32> -> vector<16x8xf32>
    %c0_3 = arith.constant 0 : index
    %c0_4 = arith.constant 0 : index
    %3 = vector.load %arg2[%c0_3, %c0_4] : memref<8x32xf32, #tpu.memory_space<vmem>>, vector<8x32xf32>
    %cst_5 = arith.constant dense<0.000000e+00> : vector<16x32xf32>
    %4 = tpu.matmul %2, %3, %cst_5 {dimension_numbers = #tpu.dot_dimension_numbers<[1], [0], [0], [1], [0, 0, 1, 1], [], []>} : vector<16x8xf32>, vector<8x32xf32>, vector<16x32xf32> -> vector<16x32xf32>
    %c0_6 = arith.constant 0 : index
    %c0_7 = arith.constant 0 : index
    %5 = vector.load %arg4[%c0_6, %c0_7] : memref<8x32xf32, #tpu.memory_space<vmem>>, vector<1x32xf32>
    %6 = vector.broadcast %5 : vector<1x32xf32> to vector<16x32xf32>
    %7 = arith.addf %4, %6 : vector<16x32xf32>
    %cst_8 = arith.constant 0.000000e+00 : f32
    %8 = vector.broadcast %cst_8 : f32 to vector<16x32xf32>
    %9 = arith.maximumf %7, %8 : vector<16x32xf32>
    %c0_9 = arith.constant 0 : index
    %c0_10 = arith.constant 0 : index
    %c0_11 = arith.constant 0 : index
    %10 = vector.load %arg5[%c0_9, %c0_10, %c0_11] : memref<8x32x4xf32, #tpu.memory_space<vmem>>, vector<1x32x4xf32>
    %11 = vector.shape_cast %10 : vector<1x32x4xf32> to vector<32x4xf32>
    %cst_12 = arith.constant dense<0.000000e+00> : vector<16x4xf32>
    %12 = tpu.matmul %9, %11, %cst_12 {dimension_numbers = #tpu.dot_dimension_numbers<[1], [0], [0], [1], [0, 0, 1, 1], [], []>} : vector<16x32xf32>, vector<32x4xf32>, vector<16x4xf32> -> vector<16x4xf32>
    %cst_13 = arith.constant dense<0.000000e+00> : vector<16x32xf32>
    %13 = tpu.matmul %0, %9, %cst_13 {dimension_numbers = #tpu.dot_dimension_numbers<[1], [0], [0], [1], [0, 0, 1, 1], [], []>} : vector<16x16xf32>, vector<16x32xf32>, vector<16x32xf32> -> vector<16x32xf32>
    %c0_14 = arith.constant 0 : index
    %c0_15 = arith.constant 0 : index
    %c0_16 = arith.constant 0 : index
    %14 = vector.load %arg3[%c0_14, %c0_15, %c0_16] : memref<7x32x32xf32, #tpu.memory_space<vmem>>, vector<1x32x32xf32>
    %15 = vector.shape_cast %14 : vector<1x32x32xf32> to vector<32x32xf32>
    %cst_17 = arith.constant dense<0.000000e+00> : vector<16x32xf32>
    %16 = tpu.matmul %13, %15, %cst_17 {dimension_numbers = #tpu.dot_dimension_numbers<[1], [0], [0], [1], [0, 0, 1, 1], [], []>} : vector<16x32xf32>, vector<32x32xf32>, vector<16x32xf32> -> vector<16x32xf32>
    %c1 = arith.constant 1 : index
    %c0_18 = arith.constant 0 : index
    %17 = vector.load %arg4[%c1, %c0_18] : memref<8x32xf32, #tpu.memory_space<vmem>>, vector<1x32xf32>
    %18 = vector.broadcast %17 : vector<1x32xf32> to vector<16x32xf32>
    %19 = arith.addf %16, %18 : vector<16x32xf32>
    %cst_19 = arith.constant 0.000000e+00 : f32
    %20 = vector.broadcast %cst_19 : f32 to vector<16x32xf32>
    %21 = arith.maximumf %19, %20 : vector<16x32xf32>
    %c1_20 = arith.constant 1 : index
    %c0_21 = arith.constant 0 : index
    %c0_22 = arith.constant 0 : index
    %22 = vector.load %arg5[%c1_20, %c0_21, %c0_22] : memref<8x32x4xf32, #tpu.memory_space<vmem>>, vector<1x32x4xf32>
    %23 = vector.shape_cast %22 : vector<1x32x4xf32> to vector<32x4xf32>
    %cst_23 = arith.constant dense<0.000000e+00> : vector<16x4xf32>
    %24 = tpu.matmul %21, %23, %cst_23 {dimension_numbers = #tpu.dot_dimension_numbers<[1], [0], [0], [1], [0, 0, 1, 1], [], []>} : vector<16x32xf32>, vector<32x4xf32>, vector<16x4xf32> -> vector<16x4xf32>
    %25 = arith.addf %12, %24 : vector<16x4xf32>
    %cst_24 = arith.constant dense<0.000000e+00> : vector<16x32xf32>
    %26 = tpu.matmul %0, %21, %cst_24 {dimension_numbers = #tpu.dot_dimension_numbers<[1], [0], [0], [1], [0, 0, 1, 1], [], []>} : vector<16x16xf32>, vector<16x32xf32>, vector<16x32xf32> -> vector<16x32xf32>
    %c1_25 = arith.constant 1 : index
    %c0_26 = arith.constant 0 : index
    %c0_27 = arith.constant 0 : index
    %27 = vector.load %arg3[%c1_25, %c0_26, %c0_27] : memref<7x32x32xf32, #tpu.memory_space<vmem>>, vector<1x32x32xf32>
    %28 = vector.shape_cast %27 : vector<1x32x32xf32> to vector<32x32xf32>
    %cst_28 = arith.constant dense<0.000000e+00> : vector<16x32xf32>
    %29 = tpu.matmul %26, %28, %cst_28 {dimension_numbers = #tpu.dot_dimension_numbers<[1], [0], [0], [1], [0, 0, 1, 1], [], []>} : vector<16x32xf32>, vector<32x32xf32>, vector<16x32xf32> -> vector<16x32xf32>
    %c2 = arith.constant 2 : index
    %c0_29 = arith.constant 0 : index
    %30 = vector.load %arg4[%c2, %c0_29] : memref<8x32xf32, #tpu.memory_space<vmem>>, vector<1x32xf32>
    %31 = vector.broadcast %30 : vector<1x32xf32> to vector<16x32xf32>
    %32 = arith.addf %29, %31 : vector<16x32xf32>
    %cst_30 = arith.constant 0.000000e+00 : f32
    %33 = vector.broadcast %cst_30 : f32 to vector<16x32xf32>
    %34 = arith.maximumf %32, %33 : vector<16x32xf32>
    %c2_31 = arith.constant 2 : index
    %c0_32 = arith.constant 0 : index
    %c0_33 = arith.constant 0 : index
    %35 = vector.load %arg5[%c2_31, %c0_32, %c0_33] : memref<8x32x4xf32, #tpu.memory_space<vmem>>, vector<1x32x4xf32>
    %36 = vector.shape_cast %35 : vector<1x32x4xf32> to vector<32x4xf32>
    %cst_34 = arith.constant dense<0.000000e+00> : vector<16x4xf32>
    %37 = tpu.matmul %34, %36, %cst_34 {dimension_numbers = #tpu.dot_dimension_numbers<[1], [0], [0], [1], [0, 0, 1, 1], [], []>} : vector<16x32xf32>, vector<32x4xf32>, vector<16x4xf32> -> vector<16x4xf32>
    %38 = arith.addf %25, %37 : vector<16x4xf32>
    %cst_35 = arith.constant dense<0.000000e+00> : vector<16x32xf32>
    %39 = tpu.matmul %0, %34, %cst_35 {dimension_numbers = #tpu.dot_dimension_numbers<[1], [0], [0], [1], [0, 0, 1, 1], [], []>} : vector<16x16xf32>, vector<16x32xf32>, vector<16x32xf32> -> vector<16x32xf32>
    %c2_36 = arith.constant 2 : index
    %c0_37 = arith.constant 0 : index
    %c0_38 = arith.constant 0 : index
    %40 = vector.load %arg3[%c2_36, %c0_37, %c0_38] : memref<7x32x32xf32, #tpu.memory_space<vmem>>, vector<1x32x32xf32>
    %41 = vector.shape_cast %40 : vector<1x32x32xf32> to vector<32x32xf32>
    %cst_39 = arith.constant dense<0.000000e+00> : vector<16x32xf32>
    %42 = tpu.matmul %39, %41, %cst_39 {dimension_numbers = #tpu.dot_dimension_numbers<[1], [0], [0], [1], [0, 0, 1, 1], [], []>} : vector<16x32xf32>, vector<32x32xf32>, vector<16x32xf32> -> vector<16x32xf32>
    %c3 = arith.constant 3 : index
    %c0_40 = arith.constant 0 : index
    %43 = vector.load %arg4[%c3, %c0_40] : memref<8x32xf32, #tpu.memory_space<vmem>>, vector<1x32xf32>
    %44 = vector.broadcast %43 : vector<1x32xf32> to vector<16x32xf32>
    %45 = arith.addf %42, %44 : vector<16x32xf32>
    %cst_41 = arith.constant 0.000000e+00 : f32
    %46 = vector.broadcast %cst_41 : f32 to vector<16x32xf32>
    %47 = arith.maximumf %45, %46 : vector<16x32xf32>
    %c3_42 = arith.constant 3 : index
    %c0_43 = arith.constant 0 : index
    %c0_44 = arith.constant 0 : index
    %48 = vector.load %arg5[%c3_42, %c0_43, %c0_44] : memref<8x32x4xf32, #tpu.memory_space<vmem>>, vector<1x32x4xf32>
    %49 = vector.shape_cast %48 : vector<1x32x4xf32> to vector<32x4xf32>
    %cst_45 = arith.constant dense<0.000000e+00> : vector<16x4xf32>
    %50 = tpu.matmul %47, %49, %cst_45 {dimension_numbers = #tpu.dot_dimension_numbers<[1], [0], [0], [1], [0, 0, 1, 1], [], []>} : vector<16x32xf32>, vector<32x4xf32>, vector<16x4xf32> -> vector<16x4xf32>
    %51 = arith.addf %38, %50 : vector<16x4xf32>
    %cst_46 = arith.constant dense<0.000000e+00> : vector<16x32xf32>
    %52 = tpu.matmul %0, %47, %cst_46 {dimension_numbers = #tpu.dot_dimension_numbers<[1], [0], [0], [1], [0, 0, 1, 1], [], []>} : vector<16x16xf32>, vector<16x32xf32>, vector<16x32xf32> -> vector<16x32xf32>
    %c3_47 = arith.constant 3 : index
    %c0_48 = arith.constant 0 : index
    %c0_49 = arith.constant 0 : index
    %53 = vector.load %arg3[%c3_47, %c0_48, %c0_49] : memref<7x32x32xf32, #tpu.memory_space<vmem>>, vector<1x32x32xf32>
    %54 = vector.shape_cast %53 : vector<1x32x32xf32> to vector<32x32xf32>
    %cst_50 = arith.constant dense<0.000000e+00> : vector<16x32xf32>
    %55 = tpu.matmul %52, %54, %cst_50 {dimension_numbers = #tpu.dot_dimension_numbers<[1], [0], [0], [1], [0, 0, 1, 1], [], []>} : vector<16x32xf32>, vector<32x32xf32>, vector<16x32xf32> -> vector<16x32xf32>
    %c4 = arith.constant 4 : index
    %c0_51 = arith.constant 0 : index
    %56 = vector.load %arg4[%c4, %c0_51] : memref<8x32xf32, #tpu.memory_space<vmem>>, vector<1x32xf32>
    %57 = vector.broadcast %56 : vector<1x32xf32> to vector<16x32xf32>
    %58 = arith.addf %55, %57 : vector<16x32xf32>
    %cst_52 = arith.constant 0.000000e+00 : f32
    %59 = vector.broadcast %cst_52 : f32 to vector<16x32xf32>
    %60 = arith.maximumf %58, %59 : vector<16x32xf32>
    %c4_53 = arith.constant 4 : index
    %c0_54 = arith.constant 0 : index
    %c0_55 = arith.constant 0 : index
    %61 = vector.load %arg5[%c4_53, %c0_54, %c0_55] : memref<8x32x4xf32, #tpu.memory_space<vmem>>, vector<1x32x4xf32>
    %62 = vector.shape_cast %61 : vector<1x32x4xf32> to vector<32x4xf32>
    %cst_56 = arith.constant dense<0.000000e+00> : vector<16x4xf32>
    %63 = tpu.matmul %60, %62, %cst_56 {dimension_numbers = #tpu.dot_dimension_numbers<[1], [0], [0], [1], [0, 0, 1, 1], [], []>} : vector<16x32xf32>, vector<32x4xf32>, vector<16x4xf32> -> vector<16x4xf32>
    %64 = arith.addf %51, %63 : vector<16x4xf32>
    %cst_57 = arith.constant dense<0.000000e+00> : vector<16x32xf32>
    %65 = tpu.matmul %0, %60, %cst_57 {dimension_numbers = #tpu.dot_dimension_numbers<[1], [0], [0], [1], [0, 0, 1, 1], [], []>} : vector<16x16xf32>, vector<16x32xf32>, vector<16x32xf32> -> vector<16x32xf32>
    %c4_58 = arith.constant 4 : index
    %c0_59 = arith.constant 0 : index
    %c0_60 = arith.constant 0 : index
    %66 = vector.load %arg3[%c4_58, %c0_59, %c0_60] : memref<7x32x32xf32, #tpu.memory_space<vmem>>, vector<1x32x32xf32>
    %67 = vector.shape_cast %66 : vector<1x32x32xf32> to vector<32x32xf32>
    %cst_61 = arith.constant dense<0.000000e+00> : vector<16x32xf32>
    %68 = tpu.matmul %65, %67, %cst_61 {dimension_numbers = #tpu.dot_dimension_numbers<[1], [0], [0], [1], [0, 0, 1, 1], [], []>} : vector<16x32xf32>, vector<32x32xf32>, vector<16x32xf32> -> vector<16x32xf32>
    %c5 = arith.constant 5 : index
    %c0_62 = arith.constant 0 : index
    %69 = vector.load %arg4[%c5, %c0_62] : memref<8x32xf32, #tpu.memory_space<vmem>>, vector<1x32xf32>
    %70 = vector.broadcast %69 : vector<1x32xf32> to vector<16x32xf32>
    %71 = arith.addf %68, %70 : vector<16x32xf32>
    %cst_63 = arith.constant 0.000000e+00 : f32
    %72 = vector.broadcast %cst_63 : f32 to vector<16x32xf32>
    %73 = arith.maximumf %71, %72 : vector<16x32xf32>
    %c5_64 = arith.constant 5 : index
    %c0_65 = arith.constant 0 : index
    %c0_66 = arith.constant 0 : index
    %74 = vector.load %arg5[%c5_64, %c0_65, %c0_66] : memref<8x32x4xf32, #tpu.memory_space<vmem>>, vector<1x32x4xf32>
    %75 = vector.shape_cast %74 : vector<1x32x4xf32> to vector<32x4xf32>
    %cst_67 = arith.constant dense<0.000000e+00> : vector<16x4xf32>
    %76 = tpu.matmul %73, %75, %cst_67 {dimension_numbers = #tpu.dot_dimension_numbers<[1], [0], [0], [1], [0, 0, 1, 1], [], []>} : vector<16x32xf32>, vector<32x4xf32>, vector<16x4xf32> -> vector<16x4xf32>
    %77 = arith.addf %64, %76 : vector<16x4xf32>
    %cst_68 = arith.constant dense<0.000000e+00> : vector<16x32xf32>
    %78 = tpu.matmul %0, %73, %cst_68 {dimension_numbers = #tpu.dot_dimension_numbers<[1], [0], [0], [1], [0, 0, 1, 1], [], []>} : vector<16x16xf32>, vector<16x32xf32>, vector<16x32xf32> -> vector<16x32xf32>
    %c5_69 = arith.constant 5 : index
    %c0_70 = arith.constant 0 : index
    %c0_71 = arith.constant 0 : index
    %79 = vector.load %arg3[%c5_69, %c0_70, %c0_71] : memref<7x32x32xf32, #tpu.memory_space<vmem>>, vector<1x32x32xf32>
    %80 = vector.shape_cast %79 : vector<1x32x32xf32> to vector<32x32xf32>
    %cst_72 = arith.constant dense<0.000000e+00> : vector<16x32xf32>
    %81 = tpu.matmul %78, %80, %cst_72 {dimension_numbers = #tpu.dot_dimension_numbers<[1], [0], [0], [1], [0, 0, 1, 1], [], []>} : vector<16x32xf32>, vector<32x32xf32>, vector<16x32xf32> -> vector<16x32xf32>
    %c6 = arith.constant 6 : index
    %c0_73 = arith.constant 0 : index
    %82 = vector.load %arg4[%c6, %c0_73] : memref<8x32xf32, #tpu.memory_space<vmem>>, vector<1x32xf32>
    %83 = vector.broadcast %82 : vector<1x32xf32> to vector<16x32xf32>
    %84 = arith.addf %81, %83 : vector<16x32xf32>
    %cst_74 = arith.constant 0.000000e+00 : f32
    %85 = vector.broadcast %cst_74 : f32 to vector<16x32xf32>
    %86 = arith.maximumf %84, %85 : vector<16x32xf32>
    %c6_75 = arith.constant 6 : index
    %c0_76 = arith.constant 0 : index
    %c0_77 = arith.constant 0 : index
    %87 = vector.load %arg5[%c6_75, %c0_76, %c0_77] : memref<8x32x4xf32, #tpu.memory_space<vmem>>, vector<1x32x4xf32>
    %88 = vector.shape_cast %87 : vector<1x32x4xf32> to vector<32x4xf32>
    %cst_78 = arith.constant dense<0.000000e+00> : vector<16x4xf32>
    %89 = tpu.matmul %86, %88, %cst_78 {dimension_numbers = #tpu.dot_dimension_numbers<[1], [0], [0], [1], [0, 0, 1, 1], [], []>} : vector<16x32xf32>, vector<32x4xf32>, vector<16x4xf32> -> vector<16x4xf32>
    %90 = arith.addf %77, %89 : vector<16x4xf32>
    %cst_79 = arith.constant dense<0.000000e+00> : vector<16x32xf32>
    %91 = tpu.matmul %0, %86, %cst_79 {dimension_numbers = #tpu.dot_dimension_numbers<[1], [0], [0], [1], [0, 0, 1, 1], [], []>} : vector<16x16xf32>, vector<16x32xf32>, vector<16x32xf32> -> vector<16x32xf32>
    %c6_80 = arith.constant 6 : index
    %c0_81 = arith.constant 0 : index
    %c0_82 = arith.constant 0 : index
    %92 = vector.load %arg3[%c6_80, %c0_81, %c0_82] : memref<7x32x32xf32, #tpu.memory_space<vmem>>, vector<1x32x32xf32>
    %93 = vector.shape_cast %92 : vector<1x32x32xf32> to vector<32x32xf32>
    %cst_83 = arith.constant dense<0.000000e+00> : vector<16x32xf32>
    %94 = tpu.matmul %91, %93, %cst_83 {dimension_numbers = #tpu.dot_dimension_numbers<[1], [0], [0], [1], [0, 0, 1, 1], [], []>} : vector<16x32xf32>, vector<32x32xf32>, vector<16x32xf32> -> vector<16x32xf32>
    %c7 = arith.constant 7 : index
    %c0_84 = arith.constant 0 : index
    %95 = vector.load %arg4[%c7, %c0_84] : memref<8x32xf32, #tpu.memory_space<vmem>>, vector<1x32xf32>
    %96 = vector.broadcast %95 : vector<1x32xf32> to vector<16x32xf32>
    %97 = arith.addf %94, %96 : vector<16x32xf32>
    %cst_85 = arith.constant 0.000000e+00 : f32
    %98 = vector.broadcast %cst_85 : f32 to vector<16x32xf32>
    %99 = arith.maximumf %97, %98 : vector<16x32xf32>
    %c7_86 = arith.constant 7 : index
    %c0_87 = arith.constant 0 : index
    %c0_88 = arith.constant 0 : index
    %100 = vector.load %arg5[%c7_86, %c0_87, %c0_88] : memref<8x32x4xf32, #tpu.memory_space<vmem>>, vector<1x32x4xf32>
    %101 = vector.shape_cast %100 : vector<1x32x4xf32> to vector<32x4xf32>
    %cst_89 = arith.constant dense<0.000000e+00> : vector<16x4xf32>
    %102 = tpu.matmul %99, %101, %cst_89 {dimension_numbers = #tpu.dot_dimension_numbers<[1], [0], [0], [1], [0, 0, 1, 1], [], []>} : vector<16x32xf32>, vector<32x4xf32>, vector<16x4xf32> -> vector<16x4xf32>
    %103 = arith.addf %90, %102 : vector<16x4xf32>
    %c0_90 = arith.constant 0 : index
    %c0_91 = arith.constant 0 : index
    %104 = vector.load %arg6[%c0_90, %c0_91] : memref<1x4xf32, #tpu.memory_space<vmem>>, vector<1x4xf32>
    %105 = vector.broadcast %104 : vector<1x4xf32> to vector<16x4xf32>
    %106 = arith.addf %103, %105 : vector<16x4xf32>
    %c0_92 = arith.constant 0 : index
    %c0_93 = arith.constant 0 : index
    %107 = vector.load %arg7[%c0_92, %c0_93] : memref<16x4xf32, #tpu.memory_space<vmem>>, vector<16x4xf32>
    tpu.vector_store %arg7[%c0_92, %c0_93], %106 {strides = array<i32>} : memref<16x4xf32, #tpu.memory_space<vmem>>, vector<16x4xf32>,
    return
  }
}

</mosaic_0001>

<llo_original>
// kernel: tpu_custom_call.1
$region0: #{tpu_custom_call.1}
  #allocation0 [shape = 'u32[]', space=smem, size = 0x4, offset = 0x4, fixed_abs, tag = 'smem constant byte address 0x4 - core index']
  #allocation1 [shape = 'u32[144,128]{1,0:T(1,128)}', space=vmem, size = 0x12000, scoped, tag = 'internal scratch']
  %s0 = inlined_call_operand.vmem [shape: f32[16,16], index: 0, kind: input, shape index: {}]
  %s1 = inlined_call_operand.vmem [shape: f32[16,8], index: 1, kind: input, shape index: {}]
  %s2 = inlined_call_operand.vmem [shape: f32[8,32], index: 2, kind: input, shape index: {}]
  %s3 = inlined_call_operand.vmem [shape: f32[7,32,32], index: 3, kind: input, shape index: {}]
  %s4 = inlined_call_operand.vmem [shape: f32[8,32], index: 4, kind: input, shape index: {}]
  %s5 = inlined_call_operand.vmem [shape: f32[8,32,4], index: 5, kind: input, shape index: {}]
  %s6 = inlined_call_operand.vmem [shape: f32[1,4], index: 6, kind: input, shape index: {}]
  %s7 = inlined_call_operand.vmem [shape: f32[16,4], index: 7, kind: output, shape index: {}]
  %s8 = sld [smem:[#allocation0]]
  $region38: #{tpu_custom_call.1} parent=0
    _
  %s10 = ssub.s32 1, %s8
  %s11 = scalar_select 0, %s10, %s8
  // Predicated region
  $region2: #{tpu_custom_call.1} parent=0 // pred_check
    _
  $region3: #{tpu_custom_call.1} parent=0 // pred_check_branch
    %13 = sbr.rel (0) target = $region5
  $region4: #{tpu_custom_call.1} parent=0 // pred_region
    _
  $region5: #{tpu_custom_call.1} parent=0 // pred_fallthru
    _
  // Predicated region
  $region6: #{tpu_custom_call.1} parent=0 // pred_check
    _
  $region7: #{tpu_custom_call.1} parent=0 // pred_check_branch
    %15 = sbr.rel (0) target = $region9
  $region8: #{tpu_custom_call.1} parent=0 // pred_region
    _
  $region9: #{tpu_custom_call.1} parent=0 // pred_fallthru
    _
  // Predicated region
  $region10: #{tpu_custom_call.1} parent=0 // pred_check
    _
  $region11: #{tpu_custom_call.1} parent=0 // pred_check_branch
    %17 = sbr.rel (0) target = $region13
  $region12: #{tpu_custom_call.1} parent=0 // pred_region
    _
  $region13: #{tpu_custom_call.1} parent=0 // pred_fallthru
    _
  // Predicated region
  $region14: #{tpu_custom_call.1} parent=0 // pred_check
    _
  $region15: #{tpu_custom_call.1} parent=0 // pred_check_branch
    %19 = sbr.rel (0) target = $region17
  $region16: #{tpu_custom_call.1} parent=0 // pred_region
    _
  $region17: #{tpu_custom_call.1} parent=0 // pred_fallthru
    _
  // Predicated region
  $region18: #{tpu_custom_call.1} parent=0 // pred_check
    _
  $region19: #{tpu_custom_call.1} parent=0 // pred_check_branch
    %21 = sbr.rel (0) target = $region21
  $region20: #{tpu_custom_call.1} parent=0 // pred_region
    _
  $region21: #{tpu_custom_call.1} parent=0 // pred_fallthru
    _
  // Predicated region
  $region22: #{tpu_custom_call.1} parent=0 // pred_check
    _
  $region23: #{tpu_custom_call.1} parent=0 // pred_check_branch
    %23 = sbr.rel (0) target = $region25
  $region24: #{tpu_custom_call.1} parent=0 // pred_region
    _
  $region25: #{tpu_custom_call.1} parent=0 // pred_fallthru
    _
  // Predicated region
  $region26: #{tpu_custom_call.1} parent=0 // pred_check
    _
  $region27: #{tpu_custom_call.1} parent=0 // pred_check_branch
    %25 = sbr.rel (0) target = $region29
  $region28: #{tpu_custom_call.1} parent=0 // pred_region
    _
  $region29: #{tpu_custom_call.1} parent=0 // pred_fallthru
    _
  %v26 = vld [vmem:[%s0] sm:$0xff]
  %v27 = vld [vmem:[%s0 + $0x8] sm:$0xff]
  %v28 = vld [vmem:[%s1] sm:$0xff]
  %v29 = vld [vmem:[%s1 + $0x8] sm:$0xff]
  %vm30 = vcmask 130048
  %v32 = vsel %vm30, %v26, 0
  %v35 = vsel %vm30, %v27, 0
  %37 = vmatprep.subr.mxu0 0.0
  %38 = vmatpush1.msra.mxu0 %v28
  %39 = vmatprep.subr.mxu0 0.0
  %40 = vmatpush1.msra.mxu0 %v29
  %41 = vmatprep.subr.mxu0 0.0
  %42 = vmatpush1.msra.mxu0 0.0
  %43 = vmatprep.subr.mxu0 0.0
  %44 = vmatpush1.msra.mxu0 0.0
  %45 = vmatprep.subr.mxu0 0.0
  %46 = vmatpush1.msra.mxu0 0.0
  %47 = vmatprep.subr.mxu0 0.0
  %48 = vmatpush1.msra.mxu0 0.0
  %49 = vmatprep.subr.mxu0 0.0
  %50 = vmatpush1.msra.mxu0 0.0
  %51 = vmatprep.subr.mxu0 0.0
  %52 = vmatpush1.msra.mxu0 0.0
  %53 = vmatprep.subr.mxu0 0.0
  %54 = vmatpush1.msra.mxu0 0.0
  %55 = vmatprep.subr.mxu0 0.0
  %56 = vmatpush1.msra.mxu0 0.0
  %57 = vmatprep.subr.mxu0 0.0
  %58 = vmatpush1.msra.mxu0 0.0
  %59 = vmatprep.subr.mxu0 0.0
  %60 = vmatpush1.msra.mxu0 0.0
  %61 = vmatprep.subr.mxu0 0.0
  %62 = vmatpush1.msra.mxu0 0.0
  %63 = vmatprep.subr.mxu0 0.0
  %64 = vmatpush1.msra.mxu0 0.0
  %65 = vmatprep.subr.mxu0 0.0
  %66 = vmatpush1.msra.mxu0 0.0
  %67 = vmatprep.subr.mxu0 0.0
  %68 = vmatpush1.msra.mxu0 0.0
  %69 = vmatprep.subr.mxu0 0.0
  %70 = vmatpush1.msra.mxu0 0.0
  %71 = vmatprep.subr.mxu0 0.0
  %72 = vmatpush1.msra.mxu0 0.0
  %73 = vmatprep.subr.mxu0 0.0
  %74 = vmatpush1.msra.mxu0 0.0
  %75 = vmatprep.subr.mxu0 0.0
  %76 = vmatpush1.msra.mxu0 0.0
  %77 = vmatprep.subr.mxu0 0.0
  %78 = vmatpush1.msra.mxu0 0.0
  %79 = vmatprep.subr.mxu0 0.0
  %80 = vmatpush1.msra.mxu0 0.0
  %81 = vmatprep.subr.mxu0 0.0
  %82 = vmatpush1.msra.mxu0 0.0
  %83 = vmatprep.subr.mxu0 0.0
  %84 = vmatpush1.msra.mxu0 0.0
  %85 = vmatprep.subr.mxu0 0.0
  %86 = vmatpush1.msra.mxu0 0.0
  %87 = vmatprep.subr.mxu0 0.0
  %88 = vmatpush1.msra.mxu0 0.0
  %89 = vmatprep.subr.mxu0 0.0
  %90 = vmatpush1.msra.mxu0 0.0
  %91 = vmatprep.subr.mxu0 0.0
  %92 = vmatpush1.msra.mxu0 0.0
  %93 = vmatprep.subr.mxu0 0.0
  %94 = vmatpush1.msra.mxu0 0.0
  %95 = vmatprep.subr.mxu0 0.0
  %96 = vmatpush1.msra.mxu0 0.0
  %97 = vmatprep.subr.mxu0 0.0
  %98 = vmatpush1.msra.mxu0 0.0
  %99 = vmatprep.subr.mxu0 0.0
  %100 = vmatpush1.msra.mxu0 0.0
  %101 = vmatprep.mubr.f32.mxu0 0.0
  %102 = vmatmul.mubr.f32.gmra.mrb[0].mxu0 %v32
  %v103 = vpop.f32.mrb[0].mxu0
  %v104 = vadd.f32 0.0, %v103
  %v105 = vpop.f32.mrb[0].mxu0
  %106 = vmatprep.mubr.f32.mxu0 0.0
  %107 = vmatmul.mubr.f32.gmra.mrb[0].mxu0 %v35
  %v108 = vpop.f32.mrb[0].mxu0
  %v109 = vadd.f32 0.0, %v108
  %v110 = vpop.f32.mrb[0].mxu0
  %111 = vdwg.mxu0
  %v112 = vld [vmem:[%s2] sm:$0xff]
  %v113 = vld [vmem:[%s4] sm:$0x1]
  %v114 = vlaneseq
  %v115 = vshrl.u32 %v114, 7
  %v116 = vsub.s32 0, %v115
  %v117 = vrot.slane %v113, %v116
  %vm118 = vcmask 64512
  %v120 = vsel %vm118, %v104, 0
  %v123 = vsel %vm118, %v109, 0
  %125 = vmatprep.subr.mxu0 0.0
  %126 = vmatpush1.msra.mxu0 %v112
  %127 = vmatprep.subr.mxu0 0.0
  %128 = vmatpush1.msra.mxu0 0.0
  %129 = vmatprep.subr.mxu0 0.0
  %130 = vmatpush1.msra.mxu0 0.0
  %131 = vmatprep.subr.mxu0 0.0
  %132 = vmatpush1.msra.mxu0 0.0
  %133 = vmatprep.subr.mxu0 0.0
  %134 = vmatpush1.msra.mxu0 0.0
  %135 = vmatprep.subr.mxu0 0.0
  %136 = vmatpush1.msra.mxu0 0.0
  %137 = vmatprep.subr.mxu0 0.0
  %138 = vmatpush1.msra.mxu0 0.0
  %139 = vmatprep.subr.mxu0 0.0
  %140 = vmatpush1.msra.mxu0 0.0
  %141 = vmatprep.subr.mxu0 0.0
  %142 = vmatpush1.msra.mxu0 0.0
  %143 = vmatprep.subr.mxu0 0.0
  %144 = vmatpush1.msra.mxu0 0.0
  %145 = vmatprep.subr.mxu0 0.0
  %146 = vmatpush1.msra.mxu0 0.0
  %147 = vmatprep.subr.mxu0 0.0
  %148 = vmatpush1.msra.mxu0 0.0
  %149 = vmatprep.subr.mxu0 0.0
  %150 = vmatpush1.msra.mxu0 0.0
  %151 = vmatprep.subr.mxu0 0.0
  %152 = vmatpush1.msra.mxu0 0.0
  %153 = vmatprep.subr.mxu0 0.0
  %154 = vmatpush1.msra.mxu0 0.0
  %155 = vmatprep.subr.mxu0 0.0
  %156 = vmatpush1.msra.mxu0 0.0
  %157 = vmatprep.subr.mxu0 0.0
  %158 = vmatpush1.msra.mxu0 0.0
  %159 = vmatprep.subr.mxu0 0.0
  %160 = vmatpush1.msra.mxu0 0.0
  %161 = vmatprep.subr.mxu0 0.0
  %162 = vmatpush1.msra.mxu0 0.0
  %163 = vmatprep.subr.mxu0 0.0
  %164 = vmatpush1.msra.mxu0 0.0
  %165 = vmatprep.subr.mxu0 0.0
  %166 = vmatpush1.msra.mxu0 0.0
  %167 = vmatprep.subr.mxu0 0.0
  %168 = vmatpush1.msra.mxu0 0.0
  %169 = vmatprep.subr.mxu0 0.0
  %170 = vmatpush1.msra.mxu0 0.0
  %171 = vmatprep.subr.mxu0 0.0
  %172 = vmatpush1.msra.mxu0 0.0
  %173 = vmatprep.subr.mxu0 0.0
  %174 = vmatpush1.msra.mxu0 0.0
  %175 = vmatprep.subr.mxu0 0.0
  %176 = vmatpush1.msra.mxu0 0.0
  %177 = vmatprep.subr.mxu0 0.0
  %178 = vmatpush1.msra.mxu0 0.0
  %179 = vmatprep.subr.mxu0 0.0
  %180 = vmatpush1.msra.mxu0 0.0
  %181 = vmatprep.subr.mxu0 0.0
  %182 = vmatpush1.msra.mxu0 0.0
  %183 = vmatprep.subr.mxu0 0.0
  %184 = vmatpush1.msra.mxu0 0.0
  %185 = vmatprep.subr.mxu0 0.0
  %186 = vmatpush1.msra.mxu0 0.0
  %187 = vmatprep.subr.mxu0 0.0
  %188 = vmatpush1.msra.mxu0 0.0
  %189 = vmatprep.mubr.f32.mxu0 0.0
  %190 = vmatmul.mubr.f32.gmra.mrb[0].mxu0 %v120
  %v191 = vpop.f32.mrb[0].mxu0
  %v192 = vadd.f32 %v117, %v191
  %v193 = vpop.f32.mrb[0].mxu0
  %194 = vmatprep.mubr.f32.mxu0 0.0
  %195 = vmatmul.mubr.f32.gmra.mrb[0].mxu0 %v123
  %v196 = vpop.f32.mrb[0].mxu0
  %v197 = vadd.f32 %v117, %v196
  %v198 = vpop.f32.mrb[0].mxu0
  %199 = vdwg.mxu0
  %v200 = vmax.f32 %v192, 0.0
  %v201 = vmax.f32 %v197, 0.0
  %v202 = vld [vmem:[%s5] sm:$0xff]
  %v203 = vld [vmem:[%s5 + $0x8] sm:$0xff]
  %v204 = vld [vmem:[%s5 + $0x10] sm:$0xff]
  %v205 = vld [vmem:[%s5 + $0x18] sm:$0xff]
  %206 = vmatprep.subr.mxu0 0.0
  %207 = vmatpush1.msra.mxu0 %v200
  %208 = vmatprep.subr.mxu0 0.0
  %209 = vmatpush1.msra.mxu0 %v201
  %210 = vmatprep.subr.mxu0 0.0
  %211 = vmatpush1.msra.mxu0 0.0
  %212 = vmatprep.subr.mxu0 0.0
  %213 = vmatpush1.msra.mxu0 0.0
  %214 = vmatprep.subr.mxu0 0.0
  %215 = vmatpush1.msra.mxu0 0.0
  %216 = vmatprep.subr.mxu0 0.0
  %217 = vmatpush1.msra.mxu0 0.0
  %218 = vmatprep.subr.mxu0 0.0
  %219 = vmatpush1.msra.mxu0 0.0
  %220 = vmatprep.subr.mxu0 0.0
  %221 = vmatpush1.msra.mxu0 0.0
  %222 = vmatprep.subr.mxu0 0.0
  %223 = vmatpush1.msra.mxu0 0.0
  %224 = vmatprep.subr.mxu0 0.0
  %225 = vmatpush1.msra.mxu0 0.0
  %226 = vmatprep.subr.mxu0 0.0
  %227 = vmatpush1.msra.mxu0 0.0
  %228 = vmatprep.subr.mxu0 0.0
  %229 = vmatpush1.msra.mxu0 0.0
  %230 = vmatprep.subr.mxu0 0.0
  %231 = vmatpush1.msra.mxu0 0.0
  %232 = vmatprep.subr.mxu0 0.0
  %233 = vmatpush1.msra.mxu0 0.0
  %234 = vmatprep.subr.mxu0 0.0
  %235 = vmatpush1.msra.mxu0 0.0
  %236 = vmatprep.subr.mxu0 0.0
  %237 = vmatpush1.msra.mxu0 0.0
  %238 = vmatprep.subr.mxu0 0.0
  %239 = vmatpush1.msra.mxu0 0.0
  %240 = vmatprep.subr.mxu0 0.0
  %241 = vmatpush1.msra.mxu0 0.0
  %242 = vmatprep.subr.mxu0 0.0
  %243 = vmatpush1.msra.mxu0 0.0
  %244 = vmatprep.subr.mxu0 0.0
  %245 = vmatpush1.msra.mxu0 0.0
  %246 = vmatprep.subr.mxu0 0.0
  %247 = vmatpush1.msra.mxu0 0.0
  %248 = vmatprep.subr.mxu0 0.0
  %249 = vmatpush1.msra.mxu0 0.0
  %250 = vmatprep.subr.mxu0 0.0
  %251 = vmatpush1.msra.mxu0 0.0
  %252 = vmatprep.subr.mxu0 0.0
  %253 = vmatpush1.msra.mxu0 0.0
  %254 = vmatprep.subr.mxu0 0.0
  %255 = vmatpush1.msra.mxu0 0.0
  %256 = vmatprep.subr.mxu0 0.0
  %257 = vmatpush1.msra.mxu0 0.0
  %258 = vmatprep.subr.mxu0 0.0
  %259 = vmatpush1.msra.mxu0 0.0
  %260 = vmatprep.subr.mxu0 0.0
  %261 = vmatpush1.msra.mxu0 0.0
  %262 = vmatprep.subr.mxu0 0.0
  %263 = vmatpush1.msra.mxu0 0.0
  %264 = vmatprep.subr.mxu0 0.0
  %265 = vmatpush1.msra.mxu0 0.0
  %266 = vmatprep.subr.mxu0 0.0
  %267 = vmatpush1.msra.mxu0 0.0
  %268 = vmatprep.subr.mxu0 0.0
  %269 = vmatpush1.msra.mxu0 0.0
  %270 = vmatprep.mubr.f32.mxu0 0.0
  %271 = vmatmul.mubr.f32.gmra.mrb[0].mxu0 %v32
  %v272 = vpop.f32.mrb[0].mxu0
  %v273 = vadd.f32 0.0, %v272
  %v274 = vpop.f32.mrb[0].mxu0
  %275 = vmatprep.mubr.f32.mxu0 0.0
  %276 = vmatmul.mubr.f32.gmra.mrb[0].mxu0 %v35
  %v277 = vpop.f32.mrb[0].mxu0
  %v278 = vadd.f32 0.0, %v277
  %v279 = vpop.f32.mrb[0].mxu0
  %280 = vdwg.mxu0
  %v281 = vld [vmem:[%s3] sm:$0xff]
  %v282 = vld [vmem:[%s3 + $0x8] sm:$0xff]
  %v283 = vld [vmem:[%s3 + $0x10] sm:$0xff]
  %v284 = vld [vmem:[%s3 + $0x18] sm:$0xff]
  %v285 = vld [vmem:[%s4 + $0x1] sm:$0x1]
  %v286 = vlaneseq
  %v287 = vshrl.u32 %v286, 7
  %v288 = vsub.s32 0, %v287
  %v289 = vrot.slane %v285, %v288
  %vm290 = vcmask 261120
  %v292 = vsel %vm290, %v273, 0
  %v295 = vsel %vm290, %v278, 0
  %297 = vmatprep.subr.mxu0 0.0
  %298 = vmatpush1.msra.mxu0 %v281
  %299 = vmatprep.subr.mxu0 0.0
  %300 = vmatpush1.msra.mxu0 %v282
  %301 = vmatprep.subr.mxu0 0.0
  %302 = vmatpush1.msra.mxu0 %v283
  %303 = vmatprep.subr.mxu0 0.0
  %304 = vmatpush1.msra.mxu0 %v284
  %305 = vmatprep.subr.mxu0 0.0
  %306 = vmatpush1.msra.mxu0 0.0
  %307 = vmatprep.subr.mxu0 0.0
  %308 = vmatpush1.msra.mxu0 0.0
  %309 = vmatprep.subr.mxu0 0.0
  %310 = vmatpush1.msra.mxu0 0.0
  %311 = vmatprep.subr.mxu0 0.0
  %312 = vmatpush1.msra.mxu0 0.0
  %313 = vmatprep.subr.mxu0 0.0
  %314 = vmatpush1.msra.mxu0 0.0
  %315 = vmatprep.subr.mxu0 0.0
  %316 = vmatpush1.msra.mxu0 0.0
  %317 = vmatprep.subr.mxu0 0.0
  %318 = vmatpush1.msra.mxu0 0.0
  %319 = vmatprep.subr.mxu0 0.0
  %320 = vmatpush1.msra.mxu0 0.0
  %321 = vmatprep.subr.mxu0 0.0
  %322 = vmatpush1.msra.mxu0 0.0
  %323 = vmatprep.subr.mxu0 0.0
  %324 = vmatpush1.msra.mxu0 0.0
  %325 = vmatprep.subr.mxu0 0.0
  %326 = vmatpush1.msra.mxu0 0.0
  %327 = vmatprep.subr.mxu0 0.0
  %328 = vmatpush1.msra.mxu0 0.0
  %329 = vmatprep.subr.mxu0 0.0
  %330 = vmatpush1.msra.mxu0 0.0
  %331 = vmatprep.subr.mxu0 0.0
  %332 = vmatpush1.msra.mxu0 0.0
  %333 = vmatprep.subr.mxu0 0.0
  %334 = vmatpush1.msra.mxu0 0.0
  %335 = vmatprep.subr.mxu0 0.0
  %336 = vmatpush1.msra.mxu0 0.0
  %337 = vmatprep.subr.mxu0 0.0
  %338 = vmatpush1.msra.mxu0 0.0
  %339 = vmatprep.subr.mxu0 0.0
  %340 = vmatpush1.msra.mxu0 0.0
  %341 = vmatprep.subr.mxu0 0.0
  %342 = vmatpush1.msra.mxu0 0.0
  %343 = vmatprep.subr.mxu0 0.0
  %344 = vmatpush1.msra.mxu0 0.0
  %345 = vmatprep.subr.mxu0 0.0
  %346 = vmatpush1.msra.mxu0 0.0
  %347 = vmatprep.subr.mxu0 0.0
  %348 = vmatpush1.msra.mxu0 0.0
  %349 = vmatprep.subr.mxu0 0.0
  %350 = vmatpush1.msra.mxu0 0.0
  %351 = vmatprep.subr.mxu0 0.0
  %352 = vmatpush1.msra.mxu0 0.0
  %353 = vmatprep.subr.mxu0 0.0
  %354 = vmatpush1.msra.mxu0 0.0
  %355 = vmatprep.subr.mxu0 0.0
  %356 = vmatpush1.msra.mxu0 0.0
  %357 = vmatprep.subr.mxu0 0.0
  %358 = vmatpush1.msra.mxu0 0.0
  %359 = vmatprep.subr.mxu0 0.0
  %360 = vmatpush1.msra.mxu0 0.0
  %361 = vmatprep.mubr.f32.mxu0 0.0
  %362 = vmatmul.mubr.f32.gmra.mrb[0].mxu0 %v292
  %v363 = vpop.f32.mrb[0].mxu0
  %v364 = vadd.f32 %v289, %v363
  %v365 = vpop.f32.mrb[0].mxu0
  %366 = vmatprep.mubr.f32.mxu0 0.0
  %367 = vmatmul.mubr.f32.gmra.mrb[0].mxu0 %v295
  %v368 = vpop.f32.mrb[0].mxu0
  %v369 = vadd.f32 %v289, %v368
  %v370 = vpop.f32.mrb[0].mxu0
  %371 = vdwg.mxu0
  %v372 = vmax.f32 %v364, 0.0
  %v373 = vmax.f32 %v369, 0.0
  %s374 = scalar_lea.vmem %s5, 32
  %v375 = vld [vmem:[%s374] sm:$0xff]
  %v376 = vld [vmem:[%s374 + $0x8] sm:$0xff]
  %v377 = vld [vmem:[%s374 + $0x10] sm:$0xff]
  %v378 = vld [vmem:[%s374 + $0x18] sm:$0xff]
  %v380 = vsel %vm290, %v372, 0
  %v383 = vsel %vm290, %v373, 0
  %385 = vmatprep.subr.mxu0 0.0
  %386 = vmatpush1.msra.mxu0 %v375
  %387 = vmatprep.subr.mxu0 0.0
  %388 = vmatpush1.msra.mxu0 %v376
  %389 = vmatprep.subr.mxu0 0.0
  %390 = vmatpush1.msra.mxu0 %v377
  %391 = vmatprep.subr.mxu0 0.0
  %392 = vmatpush1.msra.mxu0 %v378
  %393 = vmatprep.subr.mxu0 0.0
  %394 = vmatpush1.msra.mxu0 0.0
  %395 = vmatprep.subr.mxu0 0.0
  %396 = vmatpush1.msra.mxu0 0.0
  %397 = vmatprep.subr.mxu0 0.0
  %398 = vmatpush1.msra.mxu0 0.0
  %399 = vmatprep.subr.mxu0 0.0
  %400 = vmatpush1.msra.mxu0 0.0
  %401 = vmatprep.subr.mxu0 0.0
  %402 = vmatpush1.msra.mxu0 0.0
  %403 = vmatprep.subr.mxu0 0.0
  %404 = vmatpush1.msra.mxu0 0.0
  %405 = vmatprep.subr.mxu0 0.0
  %406 = vmatpush1.msra.mxu0 0.0
  %407 = vmatprep.subr.mxu0 0.0
  %408 = vmatpush1.msra.mxu0 0.0
  %409 = vmatprep.subr.mxu0 0.0
  %410 = vmatpush1.msra.mxu0 0.0
  %411 = vmatprep.subr.mxu0 0.0
  %412 = vmatpush1.msra.mxu0 0.0
  %413 = vmatprep.subr.mxu0 0.0
  %414 = vmatpush1.msra.mxu0 0.0
  %415 = vmatprep.subr.mxu0 0.0
  %416 = vmatpush1.msra.mxu0 0.0
  %417 = vmatprep.subr.mxu0 0.0
  %418 = vmatpush1.msra.mxu0 0.0
  %419 = vmatprep.subr.mxu0 0.0
  %420 = vmatpush1.msra.mxu0 0.0
  %421 = vmatprep.subr.mxu0 0.0
  %422 = vmatpush1.msra.mxu0 0.0
  %423 = vmatprep.subr.mxu0 0.0
  %424 = vmatpush1.msra.mxu0 0.0
  %425 = vmatprep.subr.mxu0 0.0
  %426 = vmatpush1.msra.mxu0 0.0
  %427 = vmatprep.subr.mxu0 0.0
  %428 = vmatpush1.msra.mxu0 0.0
  %429 = vmatprep.subr.mxu0 0.0
  %430 = vmatpush1.msra.mxu0 0.0
  %431 = vmatprep.subr.mxu0 0.0
  %432 = vmatpush1.msra.mxu0 0.0
  %433 = vmatprep.subr.mxu0 0.0
  %434 = vmatpush1.msra.mxu0 0.0
  %435 = vmatprep.subr.mxu0 0.0
  %436 = vmatpush1.msra.mxu0 0.0
  %437 = vmatprep.subr.mxu0 0.0
  %438 = vmatpush1.msra.mxu0 0.0
  %439 = vmatprep.subr.mxu0 0.0
  %440 = vmatpush1.msra.mxu0 0.0
  %441 = vmatprep.subr.mxu0 0.0
  %442 = vmatpush1.msra.mxu0 0.0
  %443 = vmatprep.subr.mxu0 0.0
  %444 = vmatpush1.msra.mxu0 0.0
  %445 = vmatprep.subr.mxu0 0.0
  %446 = vmatpush1.msra.mxu0 0.0
  %447 = vmatprep.subr.mxu0 0.0
  %448 = vmatpush1.msra.mxu0 0.0
  %449 = vmatprep.mubr.f32.mxu0 0.0
  %450 = vmatmul.mubr.f32.gmra.mrb[0].mxu0 %v380
  %v451 = vpop.f32.mrb[0].mxu0
  %v452 = vadd.f32 0.0, %v451
  %v453 = vpop.f32.mrb[0].mxu0
  %454 = vmatprep.mubr.f32.mxu0 0.0
  %455 = vmatmul.mubr.f32.gmra.mrb[0].mxu0 %v383
  %v456 = vpop.f32.mrb[0].mxu0
  %v457 = vadd.f32 0.0, %v456
  %v458 = vpop.f32.mrb[0].mxu0
  %459 = vdwg.mxu0
  %v461 = vsel %vm290, %v200, 0
  %v464 = vsel %vm290, %v201, 0
  %466 = vmatprep.subr.mxu0 0.0
  %467 = vmatpush1.msra.mxu0 %v202
  %468 = vmatprep.subr.mxu0 0.0
  %469 = vmatpush1.msra.mxu0 %v203
  %470 = vmatprep.subr.mxu0 0.0
  %471 = vmatpush1.msra.mxu0 %v204
  %472 = vmatprep.subr.mxu0 0.0
  %473 = vmatpush1.msra.mxu0 %v205
  %474 = vmatprep.subr.mxu0 0.0
  %475 = vmatpush1.msra.mxu0 0.0
  %476 = vmatprep.subr.mxu0 0.0
  %477 = vmatpush1.msra.mxu0 0.0
  %478 = vmatprep.subr.mxu0 0.0
  %479 = vmatpush1.msra.mxu0 0.0
  %480 = vmatprep.subr.mxu0 0.0
  %481 = vmatpush1.msra.mxu0 0.0
  %482 = vmatprep.subr.mxu0 0.0
  %483 = vmatpush1.msra.mxu0 0.0
  %484 = vmatprep.subr.mxu0 0.0
  %485 = vmatpush1.msra.mxu0 0.0
  %486 = vmatprep.subr.mxu0 0.0
  %487 = vmatpush1.msra.mxu0 0.0
  %488 = vmatprep.subr.mxu0 0.0
  %489 = vmatpush1.msra.mxu0 0.0
  %490 = vmatprep.subr.mxu0 0.0
  %491 = vmatpush1.msra.mxu0 0.0
  %492 = vmatprep.subr.mxu0 0.0
  %493 = vmatpush1.msra.mxu0 0.0
  %494 = vmatprep.subr.mxu0 0.0
  %495 = vmatpush1.msra.mxu0 0.0
  %496 = vmatprep.subr.mxu0 0.0
  %497 = vmatpush1.msra.mxu0 0.0
  %498 = vmatprep.subr.mxu0 0.0
  %499 = vmatpush1.msra.mxu0 0.0
  %500 = vmatprep.subr.mxu0 0.0
  %501 = vmatpush1.msra.mxu0 0.0
  %502 = vmatprep.subr.mxu0 0.0
  %503 = vmatpush1.msra.mxu0 0.0
  %504 = vmatprep.subr.mxu0 0.0
  %505 = vmatpush1.msra.mxu0 0.0
  %506 = vmatprep.subr.mxu0 0.0
  %507 = vmatpush1.msra.mxu0 0.0
  %508 = vmatprep.subr.mxu0 0.0
  %509 = vmatpush1.msra.mxu0 0.0
  %510 = vmatprep.subr.mxu0 0.0
  %511 = vmatpush1.msra.mxu0 0.0
  %512 = vmatprep.subr.mxu0 0.0
  %513 = vmatpush1.msra.mxu0 0.0
  %514 = vmatprep.subr.mxu0 0.0
  %515 = vmatpush1.msra.mxu0 0.0
  %516 = vmatprep.subr.mxu0 0.0
  %517 = vmatpush1.msra.mxu0 0.0
  %518 = vmatprep.subr.mxu0 0.0
  %519 = vmatpush1.msra.mxu0 0.0
  %520 = vmatprep.subr.mxu0 0.0
  %521 = vmatpush1.msra.mxu0 0.0
  %522 = vmatprep.subr.mxu0 0.0
  %523 = vmatpush1.msra.mxu0 0.0
  %524 = vmatprep.subr.mxu0 0.0
  %525 = vmatpush1.msra.mxu0 0.0
  %526 = vmatprep.subr.mxu0 0.0
  %527 = vmatpush1.msra.mxu0 0.0
  %528 = vmatprep.subr.mxu0 0.0
  %529 = vmatpush1.msra.mxu0 0.0
  %530 = vmatprep.mubr.f32.mxu0 0.0
  %531 = vmatmul.mubr.f32.gmra.mrb[0].mxu0 %v461
  %v532 = vpop.f32.mrb[0].mxu0
  %v533 = vadd.f32 %v452, %v532
  %v534 = vpop.f32.mrb[0].mxu0
  %535 = vmatprep.mubr.f32.mxu0 0.0
  %536 = vmatmul.mubr.f32.gmra.mrb[0].mxu0 %v464
  %v537 = vpop.f32.mrb[0].mxu0
  %v538 = vadd.f32 %v457, %v537
  %v539 = vpop.f32.mrb[0].mxu0
  %540 = vdwg.mxu0
  %541 = vmatprep.subr.mxu0 0.0
  %542 = vmatpush1.msra.mxu0 %v372
  %543 = vmatprep.subr.mxu0 0.0
  %544 = vmatpush1.msra.mxu0 %v373
  %545 = vmatprep.subr.mxu0 0.0
  %546 = vmatpush1.msra.mxu0 0.0
  %547 = vmatprep.subr.mxu0 0.0
  %548 = vmatpush1.msra.mxu0 0.0
  %549 = vmatprep.subr.mxu0 0.0
  %550 = vmatpush1.msra.mxu0 0.0
  %551 = vmatprep.subr.mxu0 0.0
  %552 = vmatpush1.msra.mxu0 0.0
  %553 = vmatprep.subr.mxu0 0.0
  %554 = vmatpush1.msra.mxu0 0.0
  %555 = vmatprep.subr.mxu0 0.0
  %556 = vmatpush1.msra.mxu0 0.0
  %557 = vmatprep.subr.mxu0 0.0
  %558 = vmatpush1.msra.mxu0 0.0
  %559 = vmatprep.subr.mxu0 0.0
  %560 = vmatpush1.msra.mxu0 0.0
  %561 = vmatprep.subr.mxu0 0.0
  %562 = vmatpush1.msra.mxu0 0.0
  %563 = vmatprep.subr.mxu0 0.0
  %564 = vmatpush1.msra.mxu0 0.0
  %565 = vmatprep.subr.mxu0 0.0
  %566 = vmatpush1.msra.mxu0 0.0
  %567 = vmatprep.subr.mxu0 0.0
  %568 = vmatpush1.msra.mxu0 0.0
  %569 = vmatprep.subr.mxu0 0.0
  %570 = vmatpush1.msra.mxu0 0.0
  %571 = vmatprep.subr.mxu0 0.0
  %572 = vmatpush1.msra.mxu0 0.0
  %573 = vmatprep.subr.mxu0 0.0
  %574 = vmatpush1.msra.mxu0 0.0
  %575 = vmatprep.subr.mxu0 0.0
  %576 = vmatpush1.msra.mxu0 0.0
  %577 = vmatprep.subr.mxu0 0.0
  %578 = vmatpush1.msra.mxu0 0.0
  %579 = vmatprep.subr.mxu0 0.0
  %580 = vmatpush1.msra.mxu0 0.0
  %581 = vmatprep.subr.mxu0 0.0
  %582 = vmatpush1.msra.mxu0 0.0
  %583 = vmatprep.subr.mxu0 0.0
  %584 = vmatpush1.msra.mxu0 0.0
  %585 = vmatprep.subr.mxu0 0.0
  %586 = vmatpush1.msra.mxu0 0.0
  %587 = vmatprep.subr.mxu0 0.0
  %588 = vmatpush1.msra.mxu0 0.0
  %589 = vmatprep.subr.mxu0 0.0
  %590 = vmatpush1.msra.mxu0 0.0
  %591 = vmatprep.subr.mxu0 0.0
  %592 = vmatpush1.msra.mxu0 0.0
  %593 = vmatprep.subr.mxu0 0.0
  %594 = vmatpush1.msra.mxu0 0.0
  %595 = vmatprep.subr.mxu0 0.0
  %596 = vmatpush1.msra.mxu0 0.0
  %597 = vmatprep.subr.mxu0 0.0
  %598 = vmatpush1.msra.mxu0 0.0
  %599 = vmatprep.subr.mxu0 0.0
  %600 = vmatpush1.msra.mxu0 0.0
  %601 = vmatprep.subr.mxu0 0.0
  %602 = vmatpush1.msra.mxu0 0.0
  %603 = vmatprep.subr.mxu0 0.0
  %604 = vmatpush1.msra.mxu0 0.0
  %605 = vmatprep.mubr.f32.mxu0 0.0
  %606 = vmatmul.mubr.f32.gmra.mrb[0].mxu0 %v32
  %v607 = vpop.f32.mrb[0].mxu0
  %v608 = vadd.f32 0.0, %v607
  %v609 = vpop.f32.mrb[0].mxu0
  %610 = vmatprep.mubr.f32.mxu0 0.0
  %611 = vmatmul.mubr.f32.gmra.mrb[0].mxu0 %v35
  %v612 = vpop.f32.mrb[0].mxu0
  %v613 = vadd.f32 0.0, %v612
  %v614 = vpop.f32.mrb[0].mxu0
  %615 = vdwg.mxu0
  %s616 = scalar_lea.vmem %s3, 32
  %v617 = vld [vmem:[%s616] sm:$0xff]
  %v618 = vld [vmem:[%s616 + $0x8] sm:$0xff]
  %v619 = vld [vmem:[%s616 + $0x10] sm:$0xff]
  %v620 = vld [vmem:[%s616 + $0x18] sm:$0xff]
  %v621 = vld [vmem:[%s4 + $0x2] sm:$0x1]
  %v622 = vlaneseq
  %v623 = vshrl.u32 %v622, 7
  %v624 = vsub.s32 0, %v623
  %v625 = vrot.slane %v621, %v624
  %v627 = vsel %vm290, %v608, 0
  %v630 = vsel %vm290, %v613, 0
  %632 = vmatprep.subr.mxu0 0.0
  %633 = vmatpush1.msra.mxu0 %v617
  %634 = vmatprep.subr.mxu0 0.0
  %635 = vmatpush1.msra.mxu0 %v618
  %636 = vmatprep.subr.mxu0 0.0
  %637 = vmatpush1.msra.mxu0 %v619
  %638 = vmatprep.subr.mxu0 0.0
  %639 = vmatpush1.msra.mxu0 %v620
  %640 = vmatprep.subr.mxu0 0.0
  %641 = vmatpush1.msra.mxu0 0.0
  %642 = vmatprep.subr.mxu0 0.0
  %643 = vmatpush1.msra.mxu0 0.0
  %644 = vmatprep.subr.mxu0 0.0
  %645 = vmatpush1.msra.mxu0 0.0
  %646 = vmatprep.subr.mxu0 0.0
  %647 = vmatpush1.msra.mxu0 0.0
  %648 = vmatprep.subr.mxu0 0.0
  %649 = vmatpush1.msra.mxu0 0.0
  %650 = vmatprep.subr.mxu0 0.0
  %651 = vmatpush1.msra.mxu0 0.0
  %652 = vmatprep.subr.mxu0 0.0
  %653 = vmatpush1.msra.mxu0 0.0
  %654 = vmatprep.subr.mxu0 0.0
  %655 = vmatpush1.msra.mxu0 0.0
  %656 = vmatprep.subr.mxu0 0.0
  %657 = vmatpush1.msra.mxu0 0.0
  %658 = vmatprep.subr.mxu0 0.0
  %659 = vmatpush1.msra.mxu0 0.0
  %660 = vmatprep.subr.mxu0 0.0
  %661 = vmatpush1.msra.mxu0 0.0
  %662 = vmatprep.subr.mxu0 0.0
  %663 = vmatpush1.msra.mxu0 0.0
  %664 = vmatprep.subr.mxu0 0.0
  %665 = vmatpush1.msra.mxu0 0.0
  %666 = vmatprep.subr.mxu0 0.0
  %667 = vmatpush1.msra.mxu0 0.0
  %668 = vmatprep.subr.mxu0 0.0
  %669 = vmatpush1.msra.mxu0 0.0
  %670 = vmatprep.subr.mxu0 0.0
  %671 = vmatpush1.msra.mxu0 0.0
  %672 = vmatprep.subr.mxu0 0.0
  %673 = vmatpush1.msra.mxu0 0.0
  %674 = vmatprep.subr.mxu0 0.0
  %675 = vmatpush1.msra.mxu0 0.0
  %676 = vmatprep.subr.mxu0 0.0
  %677 = vmatpush1.msra.mxu0 0.0
  %678 = vmatprep.subr.mxu0 0.0
  %679 = vmatpush1.msra.mxu0 0.0
  %680 = vmatprep.subr.mxu0 0.0
  %681 = vmatpush1.msra.mxu0 0.0
  %682 = vmatprep.subr.mxu0 0.0
  %683 = vmatpush1.msra.mxu0 0.0
  %684 = vmatprep.subr.mxu0 0.0
  %685 = vmatpush1.msra.mxu0 0.0
  %686 = vmatprep.subr.mxu0 0.0
  %687 = vmatpush1.msra.mxu0 0.0
  %688 = vmatprep.subr.mxu0 0.0
  %689 = vmatpush1.msra.mxu0 0.0
  %690 = vmatprep.subr.mxu0 0.0
  %691 = vmatpush1.msra.mxu0 0.0
  %692 = vmatprep.subr.mxu0 0.0
  %693 = vmatpush1.msra.mxu0 0.0
  %694 = vmatprep.subr.mxu0 0.0
  %695 = vmatpush1.msra.mxu0 0.0
  %696 = vmatprep.mubr.f32.mxu0 0.0
  %697 = vmatmul.mubr.f32.gmra.mrb[0].mxu0 %v627
  %v698 = vpop.f32.mrb[0].mxu0
  %v699 = vadd.f32 %v625, %v698
  %v700 = vpop.f32.mrb[0].mxu0
  %701 = vmatprep.mubr.f32.mxu0 0.0
  %702 = vmatmul.mubr.f32.gmra.mrb[0].mxu0 %v630
  %v703 = vpop.f32.mrb[0].mxu0
  %v704 = vadd.f32 %v625, %v703
  %v705 = vpop.f32.mrb[0].mxu0
  %706 = vdwg.mxu0
  %v707 = vmax.f32 %v699, 0.0
  %v708 = vmax.f32 %v704, 0.0
  %s709 = scalar_lea.vmem %s5, 64
  %v710 = vld [vmem:[%s709] sm:$0xff]
  %v711 = vld [vmem:[%s709 + $0x8] sm:$0xff]
  %v712 = vld [vmem:[%s709 + $0x10] sm:$0xff]
  %v713 = vld [vmem:[%s709 + $0x18] sm:$0xff]
  %v715 = vsel %vm290, %v707, 0
  %v718 = vsel %vm290, %v708, 0
  %720 = vmatprep.subr.mxu0 0.0
  %721 = vmatpush1.msra.mxu0 %v710
  %722 = vmatprep.subr.mxu0 0.0
  %723 = vmatpush1.msra.mxu0 %v711
  %724 = vmatprep.subr.mxu0 0.0
  %725 = vmatpush1.msra.mxu0 %v712
  %726 = vmatprep.subr.mxu0 0.0
  %727 = vmatpush1.msra.mxu0 %v713
  %728 = vmatprep.subr.mxu0 0.0
  %729 = vmatpush1.msra.mxu0 0.0
  %730 = vmatprep.subr.mxu0 0.0
  %731 = vmatpush1.msra.mxu0 0.0
  %732 = vmatprep.subr.mxu0 0.0
  %733 = vmatpush1.msra.mxu0 0.0
  %734 = vmatprep.subr.mxu0 0.0
  %735 = vmatpush1.msra.mxu0 0.0
  %736 = vmatprep.subr.mxu0 0.0
  %737 = vmatpush1.msra.mxu0 0.0
  %738 = vmatprep.subr.mxu0 0.0
  %739 = vmatpush1.msra.mxu0 0.0
  %740 = vmatprep.subr.mxu0 0.0
  %741 = vmatpush1.msra.mxu0 0.0
  %742 = vmatprep.subr.mxu0 0.0
  %743 = vmatpush1.msra.mxu0 0.0
  %744 = vmatprep.subr.mxu0 0.0
  %745 = vmatpush1.msra.mxu0 0.0
  %746 = vmatprep.subr.mxu0 0.0
  %747 = vmatpush1.msra.mxu0 0.0
  %748 = vmatprep.subr.mxu0 0.0
  %749 = vmatpush1.msra.mxu0 0.0
  %750 = vmatprep.subr.mxu0 0.0
  %751 = vmatpush1.msra.mxu0 0.0
  %752 = vmatprep.subr.mxu0 0.0
  %753 = vmatpush1.msra.mxu0 0.0
  %754 = vmatprep.subr.mxu0 0.0
  %755 = vmatpush1.msra.mxu0 0.0
  %756 = vmatprep.subr.mxu0 0.0
  %757 = vmatpush1.msra.mxu0 0.0
  %758 = vmatprep.subr.mxu0 0.0
  %759 = vmatpush1.msra.mxu0 0.0
  %760 = vmatprep.subr.mxu0 0.0
  %761 = vmatpush1.msra.mxu0 0.0
  %762 = vmatprep.subr.mxu0 0.0
  %763 = vmatpush1.msra.mxu0 0.0
  %764 = vmatprep.subr.mxu0 0.0
  %765 = vmatpush1.msra.mxu0 0.0
  %766 = vmatprep.subr.mxu0 0.0
  %767 = vmatpush1.msra.mxu0 0.0
  %768 = vmatprep.subr.mxu0 0.0
  %769 = vmatpush1.msra.mxu0 0.0
  %770 = vmatprep.subr.mxu0 0.0
  %771 = vmatpush1.msra.mxu0 0.0
  %772 = vmatprep.subr.mxu0 0.0
  %773 = vmatpush1.msra.mxu0 0.0
  %774 = vmatprep.subr.mxu0 0.0
  %775 = vmatpush1.msra.mxu0 0.0
  %776 = vmatprep.subr.mxu0 0.0
  %777 = vmatpush1.msra.mxu0 0.0
  %778 = vmatprep.subr.mxu0 0.0
  %779 = vmatpush1.msra.mxu0 0.0
  %780 = vmatprep.subr.mxu0 0.0
  %781 = vmatpush1.msra.mxu0 0.0
  %782 = vmatprep.subr.mxu0 0.0
  %783 = vmatpush1.msra.mxu0 0.0
  %784 = vmatprep.mubr.f32.mxu0 0.0
  %785 = vmatmul.mubr.f32.gmra.mrb[0].mxu0 %v715
  %v786 = vpop.f32.mrb[0].mxu0
  %v787 = vadd.f32 0.0, %v786
  %v788 = vpop.f32.mrb[0].mxu0
  %789 = vmatprep.mubr.f32.mxu0 0.0
  %790 = vmatmul.mubr.f32.gmra.mrb[0].mxu0 %v718
  %v791 = vpop.f32.mrb[0].mxu0
  %v792 = vadd.f32 0.0, %v791
  %v793 = vpop.f32.mrb[0].mxu0
  %794 = vdwg.mxu0
  %v795 = vadd.f32 %v533, %v787
  %v796 = vadd.f32 %v538, %v792
  %797 = vmatprep.subr.mxu0 0.0
  %798 = vmatpush1.msra.mxu0 %v707
  %799 = vmatprep.subr.mxu0 0.0
  %800 = vmatpush1.msra.mxu0 %v708
  %801 = vmatprep.subr.mxu0 0.0
  %802 = vmatpush1.msra.mxu0 0.0
  %803 = vmatprep.subr.mxu0 0.0
  %804 = vmatpush1.msra.mxu0 0.0
  %805 = vmatprep.subr.mxu0 0.0
  %806 = vmatpush1.msra.mxu0 0.0
  %807 = vmatprep.subr.mxu0 0.0
  %808 = vmatpush1.msra.mxu0 0.0
  %809 = vmatprep.subr.mxu0 0.0
  %810 = vmatpush1.msra.mxu0 0.0
  %811 = vmatprep.subr.mxu0 0.0
  %812 = vmatpush1.msra.mxu0 0.0
  %813 = vmatprep.subr.mxu0 0.0
  %814 = vmatpush1.msra.mxu0 0.0
  %815 = vmatprep.subr.mxu0 0.0
  %816 = vmatpush1.msra.mxu0 0.0
  %817 = vmatprep.subr.mxu0 0.0
  %818 = vmatpush1.msra.mxu0 0.0
  %819 = vmatprep.subr.mxu0 0.0
  %820 = vmatpush1.msra.mxu0 0.0
  %821 = vmatprep.subr.mxu0 0.0
  %822 = vmatpush1.msra.mxu0 0.0
  %823 = vmatprep.subr.mxu0 0.0
  %824 = vmatpush1.msra.mxu0 0.0
  %825 = vmatprep.subr.mxu0 0.0
  %826 = vmatpush1.msra.mxu0 0.0
  %827 = vmatprep.subr.mxu0 0.0
  %828 = vmatpush1.msra.mxu0 0.0
  %829 = vmatprep.subr.mxu0 0.0
  %830 = vmatpush1.msra.mxu0 0.0
  %831 = vmatprep.subr.mxu0 0.0
  %832 = vmatpush1.msra.mxu0 0.0
  %833 = vmatprep.subr.mxu0 0.0
  %834 = vmatpush1.msra.mxu0 0.0
  %835 = vmatprep.subr.mxu0 0.0
  %836 = vmatpush1.msra.mxu0 0.0
  %837 = vmatprep.subr.mxu0 0.0
  %838 = vmatpush1.msra.mxu0 0.0
  %839 = vmatprep.subr.mxu0 0.0
  %840 = vmatpush1.msra.mxu0 0.0
  %841 = vmatprep.subr.mxu0 0.0
  %842 = vmatpush1.msra.mxu0 0.0
  %843 = vmatprep.subr.mxu0 0.0
  %844 = vmatpush1.msra.mxu0 0.0
  %845 = vmatprep.subr.mxu0 0.0
  %846 = vmatpush1.msra.mxu0 0.0
  %847 = vmatprep.subr.mxu0 0.0
  %848 = vmatpush1.msra.mxu0 0.0
  %849 = vmatprep.subr.mxu0 0.0
  %850 = vmatpush1.msra.mxu0 0.0
  %851 = vmatprep.subr.mxu0 0.0
  %852 = vmatpush1.msra.mxu0 0.0
  %853 = vmatprep.subr.mxu0 0.0
  %854 = vmatpush1.msra.mxu0 0.0
  %855 = vmatprep.subr.mxu0 0.0
  %856 = vmatpush1.msra.mxu0 0.0
  %857 = vmatprep.subr.mxu0 0.0
  %858 = vmatpush1.msra.mxu0 0.0
  %859 = vmatprep.subr.mxu0 0.0
  %860 = vmatpush1.msra.mxu0 0.0
  %861 = vmatprep.mubr.f32.mxu0 0.0
  %862 = vmatmul.mubr.f32.gmra.mrb[0].mxu0 %v32
  %v863 = vpop.f32.mrb[0].mxu0
  %v864 = vadd.f32 0.0, %v863
  %v865 = vpop.f32.mrb[0].mxu0
  %866 = vmatprep.mubr.f32.mxu0 0.0
  %867 = vmatmul.mubr.f32.gmra.mrb[0].mxu0 %v35
  %v868 = vpop.f32.mrb[0].mxu0
  %v869 = vadd.f32 0.0, %v868
  %v870 = vpop.f32.mrb[0].mxu0
  %871 = vdwg.mxu0
  %s872 = scalar_lea.vmem %s3, 64
  %v873 = vld [vmem:[%s872] sm:$0xff]
  %v874 = vld [vmem:[%s872 + $0x8] sm:$0xff]
  %v875 = vld [vmem:[%s872 + $0x10] sm:$0xff]
  %v876 = vld [vmem:[%s872 + $0x18] sm:$0xff]
  %v877 = vld [vmem:[%s4 + $0x3] sm:$0x1]
  %v878 = vlaneseq
  %v879 = vshrl.u32 %v878, 7
  %v880 = vsub.s32 0, %v879
  %v881 = vrot.slane %v877, %v880
  %v883 = vsel %vm290, %v864, 0
  %v886 = vsel %vm290, %v869, 0
  %888 = vmatprep.subr.mxu0 0.0
  %889 = vmatpush1.msra.mxu0 %v873
  %890 = vmatprep.subr.mxu0 0.0
  %891 = vmatpush1.msra.mxu0 %v874
  %892 = vmatprep.subr.mxu0 0.0
  %893 = vmatpush1.msra.mxu0 %v875
  %894 = vmatprep.subr.mxu0 0.0
  %895 = vmatpush1.msra.mxu0 %v876
  %896 = vmatprep.subr.mxu0 0.0
  %897 = vmatpush1.msra.mxu0 0.0
  %898 = vmatprep.subr.mxu0 0.0
  %899 = vmatpush1.msra.mxu0 0.0
  %900 = vmatprep.subr.mxu0 0.0
  %901 = vmatpush1.msra.mxu0 0.0
  %902 = vmatprep.subr.mxu0 0.0
  %903 = vmatpush1.msra.mxu0 0.0
  %904 = vmatprep.subr.mxu0 0.0
  %905 = vmatpush1.msra.mxu0 0.0
  %906 = vmatprep.subr.mxu0 0.0
  %907 = vmatpush1.msra.mxu0 0.0
  %908 = vmatprep.subr.mxu0 0.0
  %909 = vmatpush1.msra.mxu0 0.0
  %910 = vmatprep.subr.mxu0 0.0
  %911 = vmatpush1.msra.mxu0 0.0
  %912 = vmatprep.subr.mxu0 0.0
  %913 = vmatpush1.msra.mxu0 0.0
  %914 = vmatprep.subr.mxu0 0.0
  %915 = vmatpush1.msra.mxu0 0.0
  %916 = vmatprep.subr.mxu0 0.0
  %917 = vmatpush1.msra.mxu0 0.0
  %918 = vmatprep.subr.mxu0 0.0
  %919 = vmatpush1.msra.mxu0 0.0
  %920 = vmatprep.subr.mxu0 0.0
  %921 = vmatpush1.msra.mxu0 0.0
  %922 = vmatprep.subr.mxu0 0.0
  %923 = vmatpush1.msra.mxu0 0.0
  %924 = vmatprep.subr.mxu0 0.0
  %925 = vmatpush1.msra.mxu0 0.0
  %926 = vmatprep.subr.mxu0 0.0
  %927 = vmatpush1.msra.mxu0 0.0
  %928 = vmatprep.subr.mxu0 0.0
  %929 = vmatpush1.msra.mxu0 0.0
  %930 = vmatprep.subr.mxu0 0.0
  %931 = vmatpush1.msra.mxu0 0.0
  %932 = vmatprep.subr.mxu0 0.0
  %933 = vmatpush1.msra.mxu0 0.0
  %934 = vmatprep.subr.mxu0 0.0
  %935 = vmatpush1.msra.mxu0 0.0
  %936 = vmatprep.subr.mxu0 0.0
  %937 = vmatpush1.msra.mxu0 0.0
  %938 = vmatprep.subr.mxu0 0.0
  %939 = vmatpush1.msra.mxu0 0.0
  %940 = vmatprep.subr.mxu0 0.0
  %941 = vmatpush1.msra.mxu0 0.0
  %942 = vmatprep.subr.mxu0 0.0
  %943 = vmatpush1.msra.mxu0 0.0
  %944 = vmatprep.subr.mxu0 0.0
  %945 = vmatpush1.msra.mxu0 0.0
  %946 = vmatprep.subr.mxu0 0.0
  %947 = vmatpush1.msra.mxu0 0.0
  %948 = vmatprep.subr.mxu0 0.0
  %949 = vmatpush1.msra.mxu0 0.0
  %950 = vmatprep.subr.mxu0 0.0
  %951 = vmatpush1.msra.mxu0 0.0
  %952 = vmatprep.mubr.f32.mxu0 0.0
  %953 = vmatmul.mubr.f32.gmra.mrb[0].mxu0 %v883
  %v954 = vpop.f32.mrb[0].mxu0
  %v955 = vadd.f32 %v881, %v954
  %v956 = vpop.f32.mrb[0].mxu0
  %957 = vmatprep.mubr.f32.mxu0 0.0
  %958 = vmatmul.mubr.f32.gmra.mrb[0].mxu0 %v886
  %v959 = vpop.f32.mrb[0].mxu0
  %v960 = vadd.f32 %v881, %v959
  %v961 = vpop.f32.mrb[0].mxu0
  %962 = vdwg.mxu0
  %v963 = vmax.f32 %v955, 0.0
  %v964 = vmax.f32 %v960, 0.0
  %s965 = scalar_lea.vmem %s5, 96
  %v966 = vld [vmem:[%s965] sm:$0xff]
  %v967 = vld [vmem:[%s965 + $0x8] sm:$0xff]
  %v968 = vld [vmem:[%s965 + $0x10] sm:$0xff]
  %v969 = vld [vmem:[%s965 + $0x18] sm:$0xff]
  %v971 = vsel %vm290, %v963, 0
  %v974 = vsel %vm290, %v964, 0
  %976 = vmatprep.subr.mxu0 0.0
  %977 = vmatpush1.msra.mxu0 %v966
  %978 = vmatprep.subr.mxu0 0.0
  %979 = vmatpush1.msra.mxu0 %v967
  %980 = vmatprep.subr.mxu0 0.0
  %981 = vmatpush1.msra.mxu0 %v968
  %982 = vmatprep.subr.mxu0 0.0
  %983 = vmatpush1.msra.mxu0 %v969
  %984 = vmatprep.subr.mxu0 0.0
  %985 = vmatpush1.msra.mxu0 0.0
  %986 = vmatprep.subr.mxu0 0.0
  %987 = vmatpush1.msra.mxu0 0.0
  %988 = vmatprep.subr.mxu0 0.0
  %989 = vmatpush1.msra.mxu0 0.0
  %990 = vmatprep.subr.mxu0 0.0
  %991 = vmatpush1.msra.mxu0 0.0
  %992 = vmatprep.subr.mxu0 0.0
  %993 = vmatpush1.msra.mxu0 0.0
  %994 = vmatprep.subr.mxu0 0.0
  %995 = vmatpush1.msra.mxu0 0.0
  %996 = vmatprep.subr.mxu0 0.0
  %997 = vmatpush1.msra.mxu0 0.0
  %998 = vmatprep.subr.mxu0 0.0
  %999 = vmatpush1.msra.mxu0 0.0
  %1000 = vmatprep.subr.mxu0 0.0
  %1001 = vmatpush1.msra.mxu0 0.0
  %1002 = vmatprep.subr.mxu0 0.0
  %1003 = vmatpush1.msra.mxu0 0.0
  %1004 = vmatprep.subr.mxu0 0.0
  %1005 = vmatpush1.msra.mxu0 0.0
  %1006 = vmatprep.subr.mxu0 0.0
  %1007 = vmatpush1.msra.mxu0 0.0
  %1008 = vmatprep.subr.mxu0 0.0
  %1009 = vmatpush1.msra.mxu0 0.0
  %1010 = vmatprep.subr.mxu0 0.0
  %1011 = vmatpush1.msra.mxu0 0.0
  %1012 = vmatprep.subr.mxu0 0.0
  %1013 = vmatpush1.msra.mxu0 0.0
  %1014 = vmatprep.subr.mxu0 0.0
  %1015 = vmatpush1.msra.mxu0 0.0
  %1016 = vmatprep.subr.mxu0 0.0
  %1017 = vmatpush1.msra.mxu0 0.0
  %1018 = vmatprep.subr.mxu0 0.0
  %1019 = vmatpush1.msra.mxu0 0.0
  %1020 = vmatprep.subr.mxu0 0.0
  %1021 = vmatpush1.msra.mxu0 0.0
  %1022 = vmatprep.subr.mxu0 0.0
  %1023 = vmatpush1.msra.mxu0 0.0
  %1024 = vmatprep.subr.mxu0 0.0
  %1025 = vmatpush1.msra.mxu0 0.0
  %1026 = vmatprep.subr.mxu0 0.0
  %1027 = vmatpush1.msra.mxu0 0.0
  %1028 = vmatprep.subr.mxu0 0.0
  %1029 = vmatpush1.msra.mxu0 0.0
  %1030 = vmatprep.subr.mxu0 0.0
  %1031 = vmatpush1.msra.mxu0 0.0
  %1032 = vmatprep.subr.mxu0 0.0
  %1033 = vmatpush1.msra.mxu0 0.0
  %1034 = vmatprep.subr.mxu0 0.0
  %1035 = vmatpush1.msra.mxu0 0.0
  %1036 = vmatprep.subr.mxu0 0.0
  %1037 = vmatpush1.msra.mxu0 0.0
  %1038 = vmatprep.subr.mxu0 0.0
  %1039 = vmatpush1.msra.mxu0 0.0
  %1040 = vmatprep.mubr.f32.mxu0 0.0
  %1041 = vmatmul.mubr.f32.gmra.mrb[0].mxu0 %v971
  %v1042 = vpop.f32.mrb[0].mxu0
  %v1043 = vadd.f32 0.0, %v1042
  %v1044 = vpop.f32.mrb[0].mxu0
  %1045 = vmatprep.mubr.f32.mxu0 0.0
  %1046 = vmatmul.mubr.f32.gmra.mrb[0].mxu0 %v974
  %v1047 = vpop.f32.mrb[0].mxu0
  %v1048 = vadd.f32 0.0, %v1047
  %v1049 = vpop.f32.mrb[0].mxu0
  %1050 = vdwg.mxu0
  %v1051 = vadd.f32 %v795, %v1043
  %v1052 = vadd.f32 %v796, %v1048
  %1053 = vmatprep.subr.mxu0 0.0
  %1054 = vmatpush1.msra.mxu0 %v963
  %1055 = vmatprep.subr.mxu0 0.0
  %1056 = vmatpush1.msra.mxu0 %v964
  %1057 = vmatprep.subr.mxu0 0.0
  %1058 = vmatpush1.msra.mxu0 0.0
  %1059 = vmatprep.subr.mxu0 0.0
  %1060 = vmatpush1.msra.mxu0 0.0
  %1061 = vmatprep.subr.mxu0 0.0
  %1062 = vmatpush1.msra.mxu0 0.0
  %1063 = vmatprep.subr.mxu0 0.0
  %1064 = vmatpush1.msra.mxu0 0.0
  %1065 = vmatprep.subr.mxu0 0.0
  %1066 = vmatpush1.msra.mxu0 0.0
  %1067 = vmatprep.subr.mxu0 0.0
  %1068 = vmatpush1.msra.mxu0 0.0
  %1069 = vmatprep.subr.mxu0 0.0
  %1070 = vmatpush1.msra.mxu0 0.0
  %1071 = vmatprep.subr.mxu0 0.0
  %1072 = vmatpush1.msra.mxu0 0.0
  %1073 = vmatprep.subr.mxu0 0.0
  %1074 = vmatpush1.msra.mxu0 0.0
  %1075 = vmatprep.subr.mxu0 0.0
  %1076 = vmatpush1.msra.mxu0 0.0
  %1077 = vmatprep.subr.mxu0 0.0
  %1078 = vmatpush1.msra.mxu0 0.0
  %1079 = vmatprep.subr.mxu0 0.0
  %1080 = vmatpush1.msra.mxu0 0.0
  %1081 = vmatprep.subr.mxu0 0.0
  %1082 = vmatpush1.msra.mxu0 0.0
  %1083 = vmatprep.subr.mxu0 0.0
  %1084 = vmatpush1.msra.mxu0 0.0
  %1085 = vmatprep.subr.mxu0 0.0
  %1086 = vmatpush1.msra.mxu0 0.0
  %1087 = vmatprep.subr.mxu0 0.0
  %1088 = vmatpush1.msra.mxu0 0.0
  %1089 = vmatprep.subr.mxu0 0.0
  %1090 = vmatpush1.msra.mxu0 0.0
  %1091 = vmatprep.subr.mxu0 0.0
  %1092 = vmatpush1.msra.mxu0 0.0
  %1093 = vmatprep.subr.mxu0 0.0
  %1094 = vmatpush1.msra.mxu0 0.0
  %1095 = vmatprep.subr.mxu0 0.0
  %1096 = vmatpush1.msra.mxu0 0.0
  %1097 = vmatprep.subr.mxu0 0.0
  %1098 = vmatpush1.msra.mxu0 0.0
  %1099 = vmatprep.subr.mxu0 0.0
  %1100 = vmatpush1.msra.mxu0 0.0
  %1101 = vmatprep.subr.mxu0 0.0
  %1102 = vmatpush1.msra.mxu0 0.0
  %1103 = vmatprep.subr.mxu0 0.0
  %1104 = vmatpush1.msra.mxu0 0.0
  %1105 = vmatprep.subr.mxu0 0.0
  %1106 = vmatpush1.msra.mxu0 0.0
  %1107 = vmatprep.subr.mxu0 0.0
  %1108 = vmatpush1.msra.mxu0 0.0
  %1109 = vmatprep.subr.mxu0 0.0
  %1110 = vmatpush1.msra.mxu0 0.0
  %1111 = vmatprep.subr.mxu0 0.0
  %1112 = vmatpush1.msra.mxu0 0.0
  %1113 = vmatprep.subr.mxu0 0.0
  %1114 = vmatpush1.msra.mxu0 0.0
  %1115 = vmatprep.subr.mxu0 0.0
  %1116 = vmatpush1.msra.mxu0 0.0
  %1117 = vmatprep.mubr.f32.mxu0 0.0
  %1118 = vmatmul.mubr.f32.gmra.mrb[0].mxu0 %v32
  %v1119 = vpop.f32.mrb[0].mxu0
  %v1120 = vadd.f32 0.0, %v1119
  %v1121 = vpop.f32.mrb[0].mxu0
  %1122 = vmatprep.mubr.f32.mxu0 0.0
  %1123 = vmatmul.mubr.f32.gmra.mrb[0].mxu0 %v35
  %v1124 = vpop.f32.mrb[0].mxu0
  %v1125 = vadd.f32 0.0, %v1124
  %v1126 = vpop.f32.mrb[0].mxu0
  %1127 = vdwg.mxu0
  %s1128 = scalar_lea.vmem %s3, 96
  %v1129 = vld [vmem:[%s1128] sm:$0xff]
  %v1130 = vld [vmem:[%s1128 + $0x8] sm:$0xff]
  %v1131 = vld [vmem:[%s1128 + $0x10] sm:$0xff]
  %v1132 = vld [vmem:[%s1128 + $0x18] sm:$0xff]
  %v1133 = vld [vmem:[%s4 + $0x4] sm:$0x1]
  %v1134 = vlaneseq
  %v1135 = vshrl.u32 %v1134, 7
  %v1136 = vsub.s32 0, %v1135
  %v1137 = vrot.slane %v1133, %v1136
  %v1139 = vsel %vm290, %v1120, 0
  %v1142 = vsel %vm290, %v1125, 0
  %1144 = vmatprep.subr.mxu0 0.0
  %1145 = vmatpush1.msra.mxu0 %v1129
  %1146 = vmatprep.subr.mxu0 0.0
  %1147 = vmatpush1.msra.mxu0 %v1130
  %1148 = vmatprep.subr.mxu0 0.0
  %1149 = vmatpush1.msra.mxu0 %v1131
  %1150 = vmatprep.subr.mxu0 0.0
  %1151 = vmatpush1.msra.mxu0 %v1132
  %1152 = vmatprep.subr.mxu0 0.0
  %1153 = vmatpush1.msra.mxu0 0.0
  %1154 = vmatprep.subr.mxu0 0.0
  %1155 = vmatpush1.msra.mxu0 0.0
  %1156 = vmatprep.subr.mxu0 0.0
  %1157 = vmatpush1.msra.mxu0 0.0
  %1158 = vmatprep.subr.mxu0 0.0
  %1159 = vmatpush1.msra.mxu0 0.0
  %1160 = vmatprep.subr.mxu0 0.0
  %1161 = vmatpush1.msra.mxu0 0.0
  %1162 = vmatprep.subr.mxu0 0.0
  %1163 = vmatpush1.msra.mxu0 0.0
  %1164 = vmatprep.subr.mxu0 0.0
  %1165 = vmatpush1.msra.mxu0 0.0
  %1166 = vmatprep.subr.mxu0 0.0
  %1167 = vmatpush1.msra.mxu0 0.0
  %1168 = vmatprep.subr.mxu0 0.0
  %1169 = vmatpush1.msra.mxu0 0.0
  %1170 = vmatprep.subr.mxu0 0.0
  %1171 = vmatpush1.msra.mxu0 0.0
  %1172 = vmatprep.subr.mxu0 0.0
  %1173 = vmatpush1.msra.mxu0 0.0
  %1174 = vmatprep.subr.mxu0 0.0
  %1175 = vmatpush1.msra.mxu0 0.0
  %1176 = vmatprep.subr.mxu0 0.0
  %1177 = vmatpush1.msra.mxu0 0.0
  %1178 = vmatprep.subr.mxu0 0.0
  %1179 = vmatpush1.msra.mxu0 0.0
  %1180 = vmatprep.subr.mxu0 0.0
  %1181 = vmatpush1.msra.mxu0 0.0
  %1182 = vmatprep.subr.mxu0 0.0
  %1183 = vmatpush1.msra.mxu0 0.0
  %1184 = vmatprep.subr.mxu0 0.0
  %1185 = vmatpush1.msra.mxu0 0.0
  %1186 = vmatprep.subr.mxu0 0.0
  %1187 = vmatpush1.msra.mxu0 0.0
  %1188 = vmatprep.subr.mxu0 0.0
  %1189 = vmatpush1.msra.mxu0 0.0
  %1190 = vmatprep.subr.mxu0 0.0
  %1191 = vmatpush1.msra.mxu0 0.0
  %1192 = vmatprep.subr.mxu0 0.0
  %1193 = vmatpush1.msra.mxu0 0.0
  %1194 = vmatprep.subr.mxu0 0.0
  %1195 = vmatpush1.msra.mxu0 0.0
  %1196 = vmatprep.subr.mxu0 0.0
  %1197 = vmatpush1.msra.mxu0 0.0
  %1198 = vmatprep.subr.mxu0 0.0
  %1199 = vmatpush1.msra.mxu0 0.0
  %1200 = vmatprep.subr.mxu0 0.0
  %1201 = vmatpush1.msra.mxu0 0.0
  %1202 = vmatprep.subr.mxu0 0.0
  %1203 = vmatpush1.msra.mxu0 0.0
  %1204 = vmatprep.subr.mxu0 0.0
  %1205 = vmatpush1.msra.mxu0 0.0
  %1206 = vmatprep.subr.mxu0 0.0
  %1207 = vmatpush1.msra.mxu0 0.0
  %1208 = vmatprep.mubr.f32.mxu0 0.0
  %1209 = vmatmul.mubr.f32.gmra.mrb[0].mxu0 %v1139
  %v1210 = vpop.f32.mrb[0].mxu0
  %v1211 = vadd.f32 %v1137, %v1210
  %v1212 = vpop.f32.mrb[0].mxu0
  %1213 = vmatprep.mubr.f32.mxu0 0.0
  %1214 = vmatmul.mubr.f32.gmra.mrb[0].mxu0 %v1142
  %v1215 = vpop.f32.mrb[0].mxu0
  %v1216 = vadd.f32 %v1137, %v1215
  %v1217 = vpop.f32.mrb[0].mxu0
  %1218 = vdwg.mxu0
  %v1219 = vmax.f32 %v1211, 0.0
  %v1220 = vmax.f32 %v1216, 0.0
  %s1221 = scalar_lea.vmem %s5, 128
  %v1222 = vld [vmem:[%s1221] sm:$0xff]
  %v1223 = vld [vmem:[%s1221 + $0x8] sm:$0xff]
  %v1224 = vld [vmem:[%s1221 + $0x10] sm:$0xff]
  %v1225 = vld [vmem:[%s1221 + $0x18] sm:$0xff]
  %v1227 = vsel %vm290, %v1219, 0
  %v1230 = vsel %vm290, %v1220, 0
  %1232 = vmatprep.subr.mxu0 0.0
  %1233 = vmatpush1.msra.mxu0 %v1222
  %1234 = vmatprep.subr.mxu0 0.0
  %1235 = vmatpush1.msra.mxu0 %v1223
  %1236 = vmatprep.subr.mxu0 0.0
  %1237 = vmatpush1.msra.mxu0 %v1224
  %1238 = vmatprep.subr.mxu0 0.0
  %1239 = vmatpush1.msra.mxu0 %v1225
  %1240 = vmatprep.subr.mxu0 0.0
  %1241 = vmatpush1.msra.mxu0 0.0
  %1242 = vmatprep.subr.mxu0 0.0
  %1243 = vmatpush1.msra.mxu0 0.0
  %1244 = vmatprep.subr.mxu0 0.0
  %1245 = vmatpush1.msra.mxu0 0.0
  %1246 = vmatprep.subr.mxu0 0.0
  %1247 = vmatpush1.msra.mxu0 0.0
  %1248 = vmatprep.subr.mxu0 0.0
  %1249 = vmatpush1.msra.mxu0 0.0
  %1250 = vmatprep.subr.mxu0 0.0
  %1251 = vmatpush1.msra.mxu0 0.0
  %1252 = vmatprep.subr.mxu0 0.0
  %1253 = vmatpush1.msra.mxu0 0.0
  %1254 = vmatprep.subr.mxu0 0.0
  %1255 = vmatpush1.msra.mxu0 0.0
  %1256 = vmatprep.subr.mxu0 0.0
  %1257 = vmatpush1.msra.mxu0 0.0
  %1258 = vmatprep.subr.mxu0 0.0
  %1259 = vmatpush1.msra.mxu0 0.0
  %1260 = vmatprep.subr.mxu0 0.0
  %1261 = vmatpush1.msra.mxu0 0.0
  %1262 = vmatprep.subr.mxu0 0.0
  %1263 = vmatpush1.msra.mxu0 0.0
  %1264 = vmatprep.subr.mxu0 0.0
  %1265 = vmatpush1.msra.mxu0 0.0
  %1266 = vmatprep.subr.mxu0 0.0
  %1267 = vmatpush1.msra.mxu0 0.0
  %1268 = vmatprep.subr.mxu0 0.0
  %1269 = vmatpush1.msra.mxu0 0.0
  %1270 = vmatprep.subr.mxu0 0.0
  %1271 = vmatpush1.msra.mxu0 0.0
  %1272 = vmatprep.subr.mxu0 0.0
  %1273 = vmatpush1.msra.mxu0 0.0
  %1274 = vmatprep.subr.mxu0 0.0
  %1275 = vmatpush1.msra.mxu0 0.0
  %1276 = vmatprep.subr.mxu0 0.0
  %1277 = vmatpush1.msra.mxu0 0.0
  %1278 = vmatprep.subr.mxu0 0.0
  %1279 = vmatpush1.msra.mxu0 0.0
  %1280 = vmatprep.subr.mxu0 0.0
  %1281 = vmatpush1.msra.mxu0 0.0
  %1282 = vmatprep.subr.mxu0 0.0
  %1283 = vmatpush1.msra.mxu0 0.0
  %1284 = vmatprep.subr.mxu0 0.0
  %1285 = vmatpush1.msra.mxu0 0.0
  %1286 = vmatprep.subr.mxu0 0.0
  %1287 = vmatpush1.msra.mxu0 0.0
  %1288 = vmatprep.subr.mxu0 0.0
  %1289 = vmatpush1.msra.mxu0 0.0
  %1290 = vmatprep.subr.mxu0 0.0
  %1291 = vmatpush1.msra.mxu0 0.0
  %1292 = vmatprep.subr.mxu0 0.0
  %1293 = vmatpush1.msra.mxu0 0.0
  %1294 = vmatprep.subr.mxu0 0.0
  %1295 = vmatpush1.msra.mxu0 0.0
  %1296 = vmatprep.mubr.f32.mxu0 0.0
  %1297 = vmatmul.mubr.f32.gmra.mrb[0].mxu0 %v1227
  %v1298 = vpop.f32.mrb[0].mxu0
  %v1299 = vadd.f32 0.0, %v1298
  %v1300 = vpop.f32.mrb[0].mxu0
  %1301 = vmatprep.mubr.f32.mxu0 0.0
  %1302 = vmatmul.mubr.f32.gmra.mrb[0].mxu0 %v1230
  %v1303 = vpop.f32.mrb[0].mxu0
  %v1304 = vadd.f32 0.0, %v1303
  %v1305 = vpop.f32.mrb[0].mxu0
  %1306 = vdwg.mxu0
  %v1307 = vadd.f32 %v1051, %v1299
  %v1308 = vadd.f32 %v1052, %v1304
  %1309 = vmatprep.subr.mxu0 0.0
  %1310 = vmatpush1.msra.mxu0 %v1219
  %1311 = vmatprep.subr.mxu0 0.0
  %1312 = vmatpush1.msra.mxu0 %v1220
  %1313 = vmatprep.subr.mxu0 0.0
  %1314 = vmatpush1.msra.mxu0 0.0
  %1315 = vmatprep.subr.mxu0 0.0
  %1316 = vmatpush1.msra.mxu0 0.0
  %1317 = vmatprep.subr.mxu0 0.0
  %1318 = vmatpush1.msra.mxu0 0.0
  %1319 = vmatprep.subr.mxu0 0.0
  %1320 = vmatpush1.msra.mxu0 0.0
  %1321 = vmatprep.subr.mxu0 0.0
  %1322 = vmatpush1.msra.mxu0 0.0
  %1323 = vmatprep.subr.mxu0 0.0
  %1324 = vmatpush1.msra.mxu0 0.0
  %1325 = vmatprep.subr.mxu0 0.0
  %1326 = vmatpush1.msra.mxu0 0.0
  %1327 = vmatprep.subr.mxu0 0.0
  %1328 = vmatpush1.msra.mxu0 0.0
  %1329 = vmatprep.subr.mxu0 0.0
  %1330 = vmatpush1.msra.mxu0 0.0
  %1331 = vmatprep.subr.mxu0 0.0
  %1332 = vmatpush1.msra.mxu0 0.0
  %1333 = vmatprep.subr.mxu0 0.0
  %1334 = vmatpush1.msra.mxu0 0.0
  %1335 = vmatprep.subr.mxu0 0.0
  %1336 = vmatpush1.msra.mxu0 0.0
  %1337 = vmatprep.subr.mxu0 0.0
  %1338 = vmatpush1.msra.mxu0 0.0
  %1339 = vmatprep.subr.mxu0 0.0
  %1340 = vmatpush1.msra.mxu0 0.0
  %1341 = vmatprep.subr.mxu0 0.0
  %1342 = vmatpush1.msra.mxu0 0.0
  %1343 = vmatprep.subr.mxu0 0.0
  %1344 = vmatpush1.msra.mxu0 0.0
  %1345 = vmatprep.subr.mxu0 0.0
  %1346 = vmatpush1.msra.mxu0 0.0
  %1347 = vmatprep.subr.mxu0 0.0
  %1348 = vmatpush1.msra.mxu0 0.0
  %1349 = vmatprep.subr.mxu0 0.0
  %1350 = vmatpush1.msra.mxu0 0.0
  %1351 = vmatprep.subr.mxu0 0.0
  %1352 = vmatpush1.msra.mxu0 0.0
  %1353 = vmatprep.subr.mxu0 0.0
  %1354 = vmatpush1.msra.mxu0 0.0
  %1355 = vmatprep.subr.mxu0 0.0
  %1356 = vmatpush1.msra.mxu0 0.0
  %1357 = vmatprep.subr.mxu0 0.0
  %1358 = vmatpush1.msra.mxu0 0.0
  %1359 = vmatprep.subr.mxu0 0.0
  %1360 = vmatpush1.msra.mxu0 0.0
  %1361 = vmatprep.subr.mxu0 0.0
  %1362 = vmatpush1.msra.mxu0 0.0
  %1363 = vmatprep.subr.mxu0 0.0
  %1364 = vmatpush1.msra.mxu0 0.0
  %1365 = vmatprep.subr.mxu0 0.0
  %1366 = vmatpush1.msra.mxu0 0.0
  %1367 = vmatprep.subr.mxu0 0.0
  %1368 = vmatpush1.msra.mxu0 0.0
  %1369 = vmatprep.subr.mxu0 0.0
  %1370 = vmatpush1.msra.mxu0 0.0
  %1371 = vmatprep.subr.mxu0 0.0
  %1372 = vmatpush1.msra.mxu0 0.0
  %1373 = vmatprep.mubr.f32.mxu0 0.0
  %1374 = vmatmul.mubr.f32.gmra.mrb[0].mxu0 %v32
  %v1375 = vpop.f32.mrb[0].mxu0
  %v1376 = vadd.f32 0.0, %v1375
  %v1377 = vpop.f32.mrb[0].mxu0
  %1378 = vmatprep.mubr.f32.mxu0 0.0
  %1379 = vmatmul.mubr.f32.gmra.mrb[0].mxu0 %v35
  %v1380 = vpop.f32.mrb[0].mxu0
  %v1381 = vadd.f32 0.0, %v1380
  %v1382 = vpop.f32.mrb[0].mxu0
  %1383 = vdwg.mxu0
  %s1384 = scalar_lea.vmem %s3, 128
  %v1385 = vld [vmem:[%s1384] sm:$0xff]
  %v1386 = vld [vmem:[%s1384 + $0x8] sm:$0xff]
  %v1387 = vld [vmem:[%s1384 + $0x10] sm:$0xff]
  %v1388 = vld [vmem:[%s1384 + $0x18] sm:$0xff]
  %v1389 = vld [vmem:[%s4 + $0x5] sm:$0x1]
  %v1390 = vlaneseq
  %v1391 = vshrl.u32 %v1390, 7
  %v1392 = vsub.s32 0, %v1391
  %v1393 = vrot.slane %v1389, %v1392
  %v1395 = vsel %vm290, %v1376, 0
  %v1398 = vsel %vm290, %v1381, 0
  %1400 = vmatprep.subr.mxu0 0.0
  %1401 = vmatpush1.msra.mxu0 %v1385
  %1402 = vmatprep.subr.mxu0 0.0
  %1403 = vmatpush1.msra.mxu0 %v1386
  %1404 = vmatprep.subr.mxu0 0.0
  %1405 = vmatpush1.msra.mxu0 %v1387
  %1406 = vmatprep.subr.mxu0 0.0
  %1407 = vmatpush1.msra.mxu0 %v1388
  %1408 = vmatprep.subr.mxu0 0.0
  %1409 = vmatpush1.msra.mxu0 0.0
  %1410 = vmatprep.subr.mxu0 0.0
  %1411 = vmatpush1.msra.mxu0 0.0
  %1412 = vmatprep.subr.mxu0 0.0
  %1413 = vmatpush1.msra.mxu0 0.0
  %1414 = vmatprep.subr.mxu0 0.0
  %1415 = vmatpush1.msra.mxu0 0.0
  %1416 = vmatprep.subr.mxu0 0.0
  %1417 = vmatpush1.msra.mxu0 0.0
  %1418 = vmatprep.subr.mxu0 0.0
  %1419 = vmatpush1.msra.mxu0 0.0
  %1420 = vmatprep.subr.mxu0 0.0
  %1421 = vmatpush1.msra.mxu0 0.0
  %1422 = vmatprep.subr.mxu0 0.0
  %1423 = vmatpush1.msra.mxu0 0.0
  %1424 = vmatprep.subr.mxu0 0.0
  %1425 = vmatpush1.msra.mxu0 0.0
  %1426 = vmatprep.subr.mxu0 0.0
  %1427 = vmatpush1.msra.mxu0 0.0
  %1428 = vmatprep.subr.mxu0 0.0
  %1429 = vmatpush1.msra.mxu0 0.0
  %1430 = vmatprep.subr.mxu0 0.0
  %1431 = vmatpush1.msra.mxu0 0.0
  %1432 = vmatprep.subr.mxu0 0.0
  %1433 = vmatpush1.msra.mxu0 0.0
  %1434 = vmatprep.subr.mxu0 0.0
  %1435 = vmatpush1.msra.mxu0 0.0
  %1436 = vmatprep.subr.mxu0 0.0
  %1437 = vmatpush1.msra.mxu0 0.0
  %1438 = vmatprep.subr.mxu0 0.0
  %1439 = vmatpush1.msra.mxu0 0.0
  %1440 = vmatprep.subr.mxu0 0.0
  %1441 = vmatpush1.msra.mxu0 0.0
  %1442 = vmatprep.subr.mxu0 0.0
  %1443 = vmatpush1.msra.mxu0 0.0
  %1444 = vmatprep.subr.mxu0 0.0
  %1445 = vmatpush1.msra.mxu0 0.0
  %1446 = vmatprep.subr.mxu0 0.0
  %1447 = vmatpush1.msra.mxu0 0.0
  %1448 = vmatprep.subr.mxu0 0.0
  %1449 = vmatpush1.msra.mxu0 0.0
  %1450 = vmatprep.subr.mxu0 0.0
  %1451 = vmatpush1.msra.mxu0 0.0
  %1452 = vmatprep.subr.mxu0 0.0
  %1453 = vmatpush1.msra.mxu0 0.0
  %1454 = vmatprep.subr.mxu0 0.0
  %1455 = vmatpush1.msra.mxu0 0.0
  %1456 = vmatprep.subr.mxu0 0.0
  %1457 = vmatpush1.msra.mxu0 0.0
  %1458 = vmatprep.subr.mxu0 0.0
  %1459 = vmatpush1.msra.mxu0 0.0
  %1460 = vmatprep.subr.mxu0 0.0
  %1461 = vmatpush1.msra.mxu0 0.0
  %1462 = vmatprep.subr.mxu0 0.0
  %1463 = vmatpush1.msra.mxu0 0.0
  %1464 = vmatprep.mubr.f32.mxu0 0.0
  %1465 = vmatmul.mubr.f32.gmra.mrb[0].mxu0 %v1395
  %v1466 = vpop.f32.mrb[0].mxu0
  %v1467 = vadd.f32 %v1393, %v1466
  %v1468 = vpop.f32.mrb[0].mxu0
  %1469 = vmatprep.mubr.f32.mxu0 0.0
  %1470 = vmatmul.mubr.f32.gmra.mrb[0].mxu0 %v1398
  %v1471 = vpop.f32.mrb[0].mxu0
  %v1472 = vadd.f32 %v1393, %v1471
  %v1473 = vpop.f32.mrb[0].mxu0
  %1474 = vdwg.mxu0
  %v1475 = vmax.f32 %v1467, 0.0
  %v1476 = vmax.f32 %v1472, 0.0
  %s1477 = scalar_lea.vmem %s5, 160
  %v1478 = vld [vmem:[%s1477] sm:$0xff]
  %v1479 = vld [vmem:[%s1477 + $0x8] sm:$0xff]
  %v1480 = vld [vmem:[%s1477 + $0x10] sm:$0xff]
  %v1481 = vld [vmem:[%s1477 + $0x18] sm:$0xff]
  %v1483 = vsel %vm290, %v1475, 0
  %v1486 = vsel %vm290, %v1476, 0
  %1488 = vmatprep.subr.mxu0 0.0
  %1489 = vmatpush1.msra.mxu0 %v1478
  %1490 = vmatprep.subr.mxu0 0.0
  %1491 = vmatpush1.msra.mxu0 %v1479
  %1492 = vmatprep.subr.mxu0 0.0
  %1493 = vmatpush1.msra.mxu0 %v1480
  %1494 = vmatprep.subr.mxu0 0.0
  %1495 = vmatpush1.msra.mxu0 %v1481
  %1496 = vmatprep.subr.mxu0 0.0
  %1497 = vmatpush1.msra.mxu0 0.0
  %1498 = vmatprep.subr.mxu0 0.0
  %1499 = vmatpush1.msra.mxu0 0.0
  %1500 = vmatprep.subr.mxu0 0.0
  %1501 = vmatpush1.msra.mxu0 0.0
  %1502 = vmatprep.subr.mxu0 0.0
  %1503 = vmatpush1.msra.mxu0 0.0
  %1504 = vmatprep.subr.mxu0 0.0
  %1505 = vmatpush1.msra.mxu0 0.0
  %1506 = vmatprep.subr.mxu0 0.0
  %1507 = vmatpush1.msra.mxu0 0.0
  %1508 = vmatprep.subr.mxu0 0.0
  %1509 = vmatpush1.msra.mxu0 0.0
  %1510 = vmatprep.subr.mxu0 0.0
  %1511 = vmatpush1.msra.mxu0 0.0
  %1512 = vmatprep.subr.mxu0 0.0
  %1513 = vmatpush1.msra.mxu0 0.0
  %1514 = vmatprep.subr.mxu0 0.0
  %1515 = vmatpush1.msra.mxu0 0.0
  %1516 = vmatprep.subr.mxu0 0.0
  %1517 = vmatpush1.msra.mxu0 0.0
  %1518 = vmatprep.subr.mxu0 0.0
  %1519 = vmatpush1.msra.mxu0 0.0
  %1520 = vmatprep.subr.mxu0 0.0
  %1521 = vmatpush1.msra.mxu0 0.0
  %1522 = vmatprep.subr.mxu0 0.0
  %1523 = vmatpush1.msra.mxu0 0.0
  %1524 = vmatprep.subr.mxu0 0.0
  %1525 = vmatpush1.msra.mxu0 0.0
  %1526 = vmatprep.subr.mxu0 0.0
  %1527 = vmatpush1.msra.mxu0 0.0
  %1528 = vmatprep.subr.mxu0 0.0
  %1529 = vmatpush1.msra.mxu0 0.0
  %1530 = vmatprep.subr.mxu0 0.0
  %1531 = vmatpush1.msra.mxu0 0.0
  %1532 = vmatprep.subr.mxu0 0.0
  %1533 = vmatpush1.msra.mxu0 0.0
  %1534 = vmatprep.subr.mxu0 0.0
  %1535 = vmatpush1.msra.mxu0 0.0
  %1536 = vmatprep.subr.mxu0 0.0
  %1537 = vmatpush1.msra.mxu0 0.0
  %1538 = vmatprep.subr.mxu0 0.0
  %1539 = vmatpush1.msra.mxu0 0.0
  %1540 = vmatprep.subr.mxu0 0.0
  %1541 = vmatpush1.msra.mxu0 0.0
  %1542 = vmatprep.subr.mxu0 0.0
  %1543 = vmatpush1.msra.mxu0 0.0
  %1544 = vmatprep.subr.mxu0 0.0
  %1545 = vmatpush1.msra.mxu0 0.0
  %1546 = vmatprep.subr.mxu0 0.0
  %1547 = vmatpush1.msra.mxu0 0.0
  %1548 = vmatprep.subr.mxu0 0.0
  %1549 = vmatpush1.msra.mxu0 0.0
  %1550 = vmatprep.subr.mxu0 0.0
  %1551 = vmatpush1.msra.mxu0 0.0
  %1552 = vmatprep.mubr.f32.mxu0 0.0
  %1553 = vmatmul.mubr.f32.gmra.mrb[0].mxu0 %v1483
  %v1554 = vpop.f32.mrb[0].mxu0
  %v1555 = vadd.f32 0.0, %v1554
  %v1556 = vpop.f32.mrb[0].mxu0
  %1557 = vmatprep.mubr.f32.mxu0 0.0
  %1558 = vmatmul.mubr.f32.gmra.mrb[0].mxu0 %v1486
  %v1559 = vpop.f32.mrb[0].mxu0
  %v1560 = vadd.f32 0.0, %v1559
  %v1561 = vpop.f32.mrb[0].mxu0
  %1562 = vdwg.mxu0
  %v1563 = vadd.f32 %v1307, %v1555
  %v1564 = vadd.f32 %v1308, %v1560
  %1565 = vmatprep.subr.mxu0 0.0
  %1566 = vmatpush1.msra.mxu0 %v1475
  %1567 = vmatprep.subr.mxu0 0.0
  %1568 = vmatpush1.msra.mxu0 %v1476
  %1569 = vmatprep.subr.mxu0 0.0
  %1570 = vmatpush1.msra.mxu0 0.0
  %1571 = vmatprep.subr.mxu0 0.0
  %1572 = vmatpush1.msra.mxu0 0.0
  %1573 = vmatprep.subr.mxu0 0.0
  %1574 = vmatpush1.msra.mxu0 0.0
  %1575 = vmatprep.subr.mxu0 0.0
  %1576 = vmatpush1.msra.mxu0 0.0
  %1577 = vmatprep.subr.mxu0 0.0
  %1578 = vmatpush1.msra.mxu0 0.0
  %1579 = vmatprep.subr.mxu0 0.0
  %1580 = vmatpush1.msra.mxu0 0.0
  %1581 = vmatprep.subr.mxu0 0.0
  %1582 = vmatpush1.msra.mxu0 0.0
  %1583 = vmatprep.subr.mxu0 0.0
  %1584 = vmatpush1.msra.mxu0 0.0
  %1585 = vmatprep.subr.mxu0 0.0
  %1586 = vmatpush1.msra.mxu0 0.0
  %1587 = vmatprep.subr.mxu0 0.0
  %1588 = vmatpush1.msra.mxu0 0.0
  %1589 = vmatprep.subr.mxu0 0.0
  %1590 = vmatpush1.msra.mxu0 0.0
  %1591 = vmatprep.subr.mxu0 0.0
  %1592 = vmatpush1.msra.mxu0 0.0
  %1593 = vmatprep.subr.mxu0 0.0
  %1594 = vmatpush1.msra.mxu0 0.0
  %1595 = vmatprep.subr.mxu0 0.0
  %1596 = vmatpush1.msra.mxu0 0.0
  %1597 = vmatprep.subr.mxu0 0.0
  %1598 = vmatpush1.msra.mxu0 0.0
  %1599 = vmatprep.subr.mxu0 0.0
  %1600 = vmatpush1.msra.mxu0 0.0
  %1601 = vmatprep.subr.mxu0 0.0
  %1602 = vmatpush1.msra.mxu0 0.0
  %1603 = vmatprep.subr.mxu0 0.0
  %1604 = vmatpush1.msra.mxu0 0.0
  %1605 = vmatprep.subr.mxu0 0.0
  %1606 = vmatpush1.msra.mxu0 0.0
  %1607 = vmatprep.subr.mxu0 0.0
  %1608 = vmatpush1.msra.mxu0 0.0
  %1609 = vmatprep.subr.mxu0 0.0
  %1610 = vmatpush1.msra.mxu0 0.0
  %1611 = vmatprep.subr.mxu0 0.0
  %1612 = vmatpush1.msra.mxu0 0.0
  %1613 = vmatprep.subr.mxu0 0.0
  %1614 = vmatpush1.msra.mxu0 0.0
  %1615 = vmatprep.subr.mxu0 0.0
  %1616 = vmatpush1.msra.mxu0 0.0
  %1617 = vmatprep.subr.mxu0 0.0
  %1618 = vmatpush1.msra.mxu0 0.0
  %1619 = vmatprep.subr.mxu0 0.0
  %1620 = vmatpush1.msra.mxu0 0.0
  %1621 = vmatprep.subr.mxu0 0.0
  %1622 = vmatpush1.msra.mxu0 0.0
  %1623 = vmatprep.subr.mxu0 0.0
  %1624 = vmatpush1.msra.mxu0 0.0
  %1625 = vmatprep.subr.mxu0 0.0
  %1626 = vmatpush1.msra.mxu0 0.0
  %1627 = vmatprep.subr.mxu0 0.0
  %1628 = vmatpush1.msra.mxu0 0.0
  %1629 = vmatprep.mubr.f32.mxu0 0.0
  %1630 = vmatmul.mubr.f32.gmra.mrb[0].mxu0 %v32
  %v1631 = vpop.f32.mrb[0].mxu0
  %v1632 = vadd.f32 0.0, %v1631
  %v1633 = vpop.f32.mrb[0].mxu0
  %1634 = vmatprep.mubr.f32.mxu0 0.0
  %1635 = vmatmul.mubr.f32.gmra.mrb[0].mxu0 %v35
  %v1636 = vpop.f32.mrb[0].mxu0
  %v1637 = vadd.f32 0.0, %v1636
  %v1638 = vpop.f32.mrb[0].mxu0
  %1639 = vdwg.mxu0
  %s1640 = scalar_lea.vmem %s3, 160
  %v1641 = vld [vmem:[%s1640] sm:$0xff]
  %v1642 = vld [vmem:[%s1640 + $0x8] sm:$0xff]
  %v1643 = vld [vmem:[%s1640 + $0x10] sm:$0xff]
  %v1644 = vld [vmem:[%s1640 + $0x18] sm:$0xff]
  %v1645 = vld [vmem:[%s4 + $0x6] sm:$0x1]
  %v1646 = vlaneseq
  %v1647 = vshrl.u32 %v1646, 7
  %v1648 = vsub.s32 0, %v1647
  %v1649 = vrot.slane %v1645, %v1648
  %v1651 = vsel %vm290, %v1632, 0
  %v1654 = vsel %vm290, %v1637, 0
  %1656 = vmatprep.subr.mxu0 0.0
  %1657 = vmatpush1.msra.mxu0 %v1641
  %1658 = vmatprep.subr.mxu0 0.0
  %1659 = vmatpush1.msra.mxu0 %v1642
  %1660 = vmatprep.subr.mxu0 0.0
  %1661 = vmatpush1.msra.mxu0 %v1643
  %1662 = vmatprep.subr.mxu0 0.0
  %1663 = vmatpush1.msra.mxu0 %v1644
  %1664 = vmatprep.subr.mxu0 0.0
  %1665 = vmatpush1.msra.mxu0 0.0
  %1666 = vmatprep.subr.mxu0 0.0
  %1667 = vmatpush1.msra.mxu0 0.0
  %1668 = vmatprep.subr.mxu0 0.0
  %1669 = vmatpush1.msra.mxu0 0.0
  %1670 = vmatprep.subr.mxu0 0.0
  %1671 = vmatpush1.msra.mxu0 0.0
  %1672 = vmatprep.subr.mxu0 0.0
  %1673 = vmatpush1.msra.mxu0 0.0
  %1674 = vmatprep.subr.mxu0 0.0
  %1675 = vmatpush1.msra.mxu0 0.0
  %1676 = vmatprep.subr.mxu0 0.0
  %1677 = vmatpush1.msra.mxu0 0.0
  %1678 = vmatprep.subr.mxu0 0.0
  %1679 = vmatpush1.msra.mxu0 0.0
  %1680 = vmatprep.subr.mxu0 0.0
  %1681 = vmatpush1.msra.mxu0 0.0
  %1682 = vmatprep.subr.mxu0 0.0
  %1683 = vmatpush1.msra.mxu0 0.0
  %1684 = vmatprep.subr.mxu0 0.0
  %1685 = vmatpush1.msra.mxu0 0.0
  %1686 = vmatprep.subr.mxu0 0.0
  %1687 = vmatpush1.msra.mxu0 0.0
  %1688 = vmatprep.subr.mxu0 0.0
  %1689 = vmatpush1.msra.mxu0 0.0
  %1690 = vmatprep.subr.mxu0 0.0
  %1691 = vmatpush1.msra.mxu0 0.0
  %1692 = vmatprep.subr.mxu0 0.0
  %1693 = vmatpush1.msra.mxu0 0.0
  %1694 = vmatprep.subr.mxu0 0.0
  %1695 = vmatpush1.msra.mxu0 0.0
  %1696 = vmatprep.subr.mxu0 0.0
  %1697 = vmatpush1.msra.mxu0 0.0
  %1698 = vmatprep.subr.mxu0 0.0
  %1699 = vmatpush1.msra.mxu0 0.0
  %1700 = vmatprep.subr.mxu0 0.0
  %1701 = vmatpush1.msra.mxu0 0.0
  %1702 = vmatprep.subr.mxu0 0.0
  %1703 = vmatpush1.msra.mxu0 0.0
  %1704 = vmatprep.subr.mxu0 0.0
  %1705 = vmatpush1.msra.mxu0 0.0
  %1706 = vmatprep.subr.mxu0 0.0
  %1707 = vmatpush1.msra.mxu0 0.0
  %1708 = vmatprep.subr.mxu0 0.0
  %1709 = vmatpush1.msra.mxu0 0.0
  %1710 = vmatprep.subr.mxu0 0.0
  %1711 = vmatpush1.msra.mxu0 0.0
  %1712 = vmatprep.subr.mxu0 0.0
  %1713 = vmatpush1.msra.mxu0 0.0
  %1714 = vmatprep.subr.mxu0 0.0
  %1715 = vmatpush1.msra.mxu0 0.0
  %1716 = vmatprep.subr.mxu0 0.0
  %1717 = vmatpush1.msra.mxu0 0.0
  %1718 = vmatprep.subr.mxu0 0.0
  %1719 = vmatpush1.msra.mxu0 0.0
  %1720 = vmatprep.mubr.f32.mxu0 0.0
  %1721 = vmatmul.mubr.f32.gmra.mrb[0].mxu0 %v1651
  %v1722 = vpop.f32.mrb[0].mxu0
  %v1723 = vadd.f32 %v1649, %v1722
  %v1724 = vpop.f32.mrb[0].mxu0
  %1725 = vmatprep.mubr.f32.mxu0 0.0
  %1726 = vmatmul.mubr.f32.gmra.mrb[0].mxu0 %v1654
  %v1727 = vpop.f32.mrb[0].mxu0
  %v1728 = vadd.f32 %v1649, %v1727
  %v1729 = vpop.f32.mrb[0].mxu0
  %1730 = vdwg.mxu0
  %v1731 = vmax.f32 %v1723, 0.0
  %v1732 = vmax.f32 %v1728, 0.0
  %s1733 = scalar_lea.vmem %s5, 192
  %v1734 = vld [vmem:[%s1733] sm:$0xff]
  %v1735 = vld [vmem:[%s1733 + $0x8] sm:$0xff]
  %v1736 = vld [vmem:[%s1733 + $0x10] sm:$0xff]
  %v1737 = vld [vmem:[%s1733 + $0x18] sm:$0xff]
  %v1739 = vsel %vm290, %v1731, 0
  %v1742 = vsel %vm290, %v1732, 0
  %1744 = vmatprep.subr.mxu0 0.0
  %1745 = vmatpush1.msra.mxu0 %v1734
  %1746 = vmatprep.subr.mxu0 0.0
  %1747 = vmatpush1.msra.mxu0 %v1735
  %1748 = vmatprep.subr.mxu0 0.0
  %1749 = vmatpush1.msra.mxu0 %v1736
  %1750 = vmatprep.subr.mxu0 0.0
  %1751 = vmatpush1.msra.mxu0 %v1737
  %1752 = vmatprep.subr.mxu0 0.0
  %1753 = vmatpush1.msra.mxu0 0.0
  %1754 = vmatprep.subr.mxu0 0.0
  %1755 = vmatpush1.msra.mxu0 0.0
  %1756 = vmatprep.subr.mxu0 0.0
  %1757 = vmatpush1.msra.mxu0 0.0
  %1758 = vmatprep.subr.mxu0 0.0
  %1759 = vmatpush1.msra.mxu0 0.0
  %1760 = vmatprep.subr.mxu0 0.0
  %1761 = vmatpush1.msra.mxu0 0.0
  %1762 = vmatprep.subr.mxu0 0.0
  %1763 = vmatpush1.msra.mxu0 0.0
  %1764 = vmatprep.subr.mxu0 0.0
  %1765 = vmatpush1.msra.mxu0 0.0
  %1766 = vmatprep.subr.mxu0 0.0
  %1767 = vmatpush1.msra.mxu0 0.0
  %1768 = vmatprep.subr.mxu0 0.0
  %1769 = vmatpush1.msra.mxu0 0.0
  %1770 = vmatprep.subr.mxu0 0.0
  %1771 = vmatpush1.msra.mxu0 0.0
  %1772 = vmatprep.subr.mxu0 0.0
  %1773 = vmatpush1.msra.mxu0 0.0
  %1774 = vmatprep.subr.mxu0 0.0
  %1775 = vmatpush1.msra.mxu0 0.0
  %1776 = vmatprep.subr.mxu0 0.0
  %1777 = vmatpush1.msra.mxu0 0.0
  %1778 = vmatprep.subr.mxu0 0.0
  %1779 = vmatpush1.msra.mxu0 0.0
  %1780 = vmatprep.subr.mxu0 0.0
  %1781 = vmatpush1.msra.mxu0 0.0
  %1782 = vmatprep.subr.mxu0 0.0
  %1783 = vmatpush1.msra.mxu0 0.0
  %1784 = vmatprep.subr.mxu0 0.0
  %1785 = vmatpush1.msra.mxu0 0.0
  %1786 = vmatprep.subr.mxu0 0.0
  %1787 = vmatpush1.msra.mxu0 0.0
  %1788 = vmatprep.subr.mxu0 0.0
  %1789 = vmatpush1.msra.mxu0 0.0
  %1790 = vmatprep.subr.mxu0 0.0
  %1791 = vmatpush1.msra.mxu0 0.0
  %1792 = vmatprep.subr.mxu0 0.0
  %1793 = vmatpush1.msra.mxu0 0.0
  %1794 = vmatprep.subr.mxu0 0.0
  %1795 = vmatpush1.msra.mxu0 0.0
  %1796 = vmatprep.subr.mxu0 0.0
  %1797 = vmatpush1.msra.mxu0 0.0
  %1798 = vmatprep.subr.mxu0 0.0
  %1799 = vmatpush1.msra.mxu0 0.0
  %1800 = vmatprep.subr.mxu0 0.0
  %1801 = vmatpush1.msra.mxu0 0.0
  %1802 = vmatprep.subr.mxu0 0.0
  %1803 = vmatpush1.msra.mxu0 0.0
  %1804 = vmatprep.subr.mxu0 0.0
  %1805 = vmatpush1.msra.mxu0 0.0
  %1806 = vmatprep.subr.mxu0 0.0
  %1807 = vmatpush1.msra.mxu0 0.0
  %1808 = vmatprep.mubr.f32.mxu0 0.0
  %1809 = vmatmul.mubr.f32.gmra.mrb[0].mxu0 %v1739
  %v1810 = vpop.f32.mrb[0].mxu0
  %v1811 = vadd.f32 0.0, %v1810
  %v1812 = vpop.f32.mrb[0].mxu0
  %1813 = vmatprep.mubr.f32.mxu0 0.0
  %1814 = vmatmul.mubr.f32.gmra.mrb[0].mxu0 %v1742
  %v1815 = vpop.f32.mrb[0].mxu0
  %v1816 = vadd.f32 0.0, %v1815
  %v1817 = vpop.f32.mrb[0].mxu0
  %1818 = vdwg.mxu0
  %v1819 = vadd.f32 %v1563, %v1811
  %v1820 = vadd.f32 %v1564, %v1816
  %1821 = vmatprep.subr.mxu0 0.0
  %1822 = vmatpush1.msra.mxu0 %v1731
  %1823 = vmatprep.subr.mxu0 0.0
  %1824 = vmatpush1.msra.mxu0 %v1732
  %1825 = vmatprep.subr.mxu0 0.0
  %1826 = vmatpush1.msra.mxu0 0.0
  %1827 = vmatprep.subr.mxu0 0.0
  %1828 = vmatpush1.msra.mxu0 0.0
  %1829 = vmatprep.subr.mxu0 0.0
  %1830 = vmatpush1.msra.mxu0 0.0
  %1831 = vmatprep.subr.mxu0 0.0
  %1832 = vmatpush1.msra.mxu0 0.0
  %1833 = vmatprep.subr.mxu0 0.0
  %1834 = vmatpush1.msra.mxu0 0.0
  %1835 = vmatprep.subr.mxu0 0.0
  %1836 = vmatpush1.msra.mxu0 0.0
  %1837 = vmatprep.subr.mxu0 0.0
  %1838 = vmatpush1.msra.mxu0 0.0
  %1839 = vmatprep.subr.mxu0 0.0
  %1840 = vmatpush1.msra.mxu0 0.0
  %1841 = vmatprep.subr.mxu0 0.0
  %1842 = vmatpush1.msra.mxu0 0.0
  %1843 = vmatprep.subr.mxu0 0.0
  %1844 = vmatpush1.msra.mxu0 0.0
  %1845 = vmatprep.subr.mxu0 0.0
  %1846 = vmatpush1.msra.mxu0 0.0
  %1847 = vmatprep.subr.mxu0 0.0
  %1848 = vmatpush1.msra.mxu0 0.0
  %1849 = vmatprep.subr.mxu0 0.0
  %1850 = vmatpush1.msra.mxu0 0.0
  %1851 = vmatprep.subr.mxu0 0.0
  %1852 = vmatpush1.msra.mxu0 0.0
  %1853 = vmatprep.subr.mxu0 0.0
  %1854 = vmatpush1.msra.mxu0 0.0
  %1855 = vmatprep.subr.mxu0 0.0
  %1856 = vmatpush1.msra.mxu0 0.0
  %1857 = vmatprep.subr.mxu0 0.0
  %1858 = vmatpush1.msra.mxu0 0.0
  %1859 = vmatprep.subr.mxu0 0.0
  %1860 = vmatpush1.msra.mxu0 0.0
  %1861 = vmatprep.subr.mxu0 0.0
  %1862 = vmatpush1.msra.mxu0 0.0
  %1863 = vmatprep.subr.mxu0 0.0
  %1864 = vmatpush1.msra.mxu0 0.0
  %1865 = vmatprep.subr.mxu0 0.0
  %1866 = vmatpush1.msra.mxu0 0.0
  %1867 = vmatprep.subr.mxu0 0.0
  %1868 = vmatpush1.msra.mxu0 0.0
  %1869 = vmatprep.subr.mxu0 0.0
  %1870 = vmatpush1.msra.mxu0 0.0
  %1871 = vmatprep.subr.mxu0 0.0
  %1872 = vmatpush1.msra.mxu0 0.0
  %1873 = vmatprep.subr.mxu0 0.0
  %1874 = vmatpush1.msra.mxu0 0.0
  %1875 = vmatprep.subr.mxu0 0.0
  %1876 = vmatpush1.msra.mxu0 0.0
  %1877 = vmatprep.subr.mxu0 0.0
  %1878 = vmatpush1.msra.mxu0 0.0
  %1879 = vmatprep.subr.mxu0 0.0
  %1880 = vmatpush1.msra.mxu0 0.0
  %1881 = vmatprep.subr.mxu0 0.0
  %1882 = vmatpush1.msra.mxu0 0.0
  %1883 = vmatprep.subr.mxu0 0.0
  %1884 = vmatpush1.msra.mxu0 0.0
  %1885 = vmatprep.mubr.f32.mxu0 0.0
  %1886 = vmatmul.mubr.f32.gmra.mrb[0].mxu0 %v32
  %v1887 = vpop.f32.mrb[0].mxu0
  %v1888 = vadd.f32 0.0, %v1887
  %v1889 = vpop.f32.mrb[0].mxu0
  %1890 = vmatprep.mubr.f32.mxu0 0.0
  %1891 = vmatmul.mubr.f32.gmra.mrb[0].mxu0 %v35
  %v1892 = vpop.f32.mrb[0].mxu0
  %v1893 = vadd.f32 0.0, %v1892
  %v1894 = vpop.f32.mrb[0].mxu0
  %1895 = vdwg.mxu0
  %s1896 = scalar_lea.vmem %s3, 192
  %v1897 = vld [vmem:[%s1896] sm:$0xff]
  %v1898 = vld [vmem:[%s1896 + $0x8] sm:$0xff]
  %v1899 = vld [vmem:[%s1896 + $0x10] sm:$0xff]
  %v1900 = vld [vmem:[%s1896 + $0x18] sm:$0xff]
  %v1901 = vld [vmem:[%s4 + $0x7] sm:$0x1]
  %v1902 = vlaneseq
  %v1903 = vshrl.u32 %v1902, 7
  %v1904 = vsub.s32 0, %v1903
  %v1905 = vrot.slane %v1901, %v1904
  %v1907 = vsel %vm290, %v1888, 0
  %v1910 = vsel %vm290, %v1893, 0
  %1912 = vmatprep.subr.mxu0 0.0
  %1913 = vmatpush1.msra.mxu0 %v1897
  %1914 = vmatprep.subr.mxu0 0.0
  %1915 = vmatpush1.msra.mxu0 %v1898
  %1916 = vmatprep.subr.mxu0 0.0
  %1917 = vmatpush1.msra.mxu0 %v1899
  %1918 = vmatprep.subr.mxu0 0.0
  %1919 = vmatpush1.msra.mxu0 %v1900
  %1920 = vmatprep.subr.mxu0 0.0
  %1921 = vmatpush1.msra.mxu0 0.0
  %1922 = vmatprep.subr.mxu0 0.0
  %1923 = vmatpush1.msra.mxu0 0.0
  %1924 = vmatprep.subr.mxu0 0.0
  %1925 = vmatpush1.msra.mxu0 0.0
  %1926 = vmatprep.subr.mxu0 0.0
  %1927 = vmatpush1.msra.mxu0 0.0
  %1928 = vmatprep.subr.mxu0 0.0
  %1929 = vmatpush1.msra.mxu0 0.0
  %1930 = vmatprep.subr.mxu0 0.0
  %1931 = vmatpush1.msra.mxu0 0.0
  %1932 = vmatprep.subr.mxu0 0.0
  %1933 = vmatpush1.msra.mxu0 0.0
  %1934 = vmatprep.subr.mxu0 0.0
  %1935 = vmatpush1.msra.mxu0 0.0
  %1936 = vmatprep.subr.mxu0 0.0
  %1937 = vmatpush1.msra.mxu0 0.0
  %1938 = vmatprep.subr.mxu0 0.0
  %1939 = vmatpush1.msra.mxu0 0.0
  %1940 = vmatprep.subr.mxu0 0.0
  %1941 = vmatpush1.msra.mxu0 0.0
  %1942 = vmatprep.subr.mxu0 0.0
  %1943 = vmatpush1.msra.mxu0 0.0
  %1944 = vmatprep.subr.mxu0 0.0
  %1945 = vmatpush1.msra.mxu0 0.0
  %1946 = vmatprep.subr.mxu0 0.0
  %1947 = vmatpush1.msra.mxu0 0.0
  %1948 = vmatprep.subr.mxu0 0.0
  %1949 = vmatpush1.msra.mxu0 0.0
  %1950 = vmatprep.subr.mxu0 0.0
  %1951 = vmatpush1.msra.mxu0 0.0
  %1952 = vmatprep.subr.mxu0 0.0
  %1953 = vmatpush1.msra.mxu0 0.0
  %1954 = vmatprep.subr.mxu0 0.0
  %1955 = vmatpush1.msra.mxu0 0.0
  %1956 = vmatprep.subr.mxu0 0.0
  %1957 = vmatpush1.msra.mxu0 0.0
  %1958 = vmatprep.subr.mxu0 0.0
  %1959 = vmatpush1.msra.mxu0 0.0
  %1960 = vmatprep.subr.mxu0 0.0
  %1961 = vmatpush1.msra.mxu0 0.0
  %1962 = vmatprep.subr.mxu0 0.0
  %1963 = vmatpush1.msra.mxu0 0.0
  %1964 = vmatprep.subr.mxu0 0.0
  %1965 = vmatpush1.msra.mxu0 0.0
  %1966 = vmatprep.subr.mxu0 0.0
  %1967 = vmatpush1.msra.mxu0 0.0
  %1968 = vmatprep.subr.mxu0 0.0
  %1969 = vmatpush1.msra.mxu0 0.0
  %1970 = vmatprep.subr.mxu0 0.0
  %1971 = vmatpush1.msra.mxu0 0.0
  %1972 = vmatprep.subr.mxu0 0.0
  %1973 = vmatpush1.msra.mxu0 0.0
  %1974 = vmatprep.subr.mxu0 0.0
  %1975 = vmatpush1.msra.mxu0 0.0
  %1976 = vmatprep.mubr.f32.mxu0 0.0
  %1977 = vmatmul.mubr.f32.gmra.mrb[0].mxu0 %v1907
  %v1978 = vpop.f32.mrb[0].mxu0
  %v1979 = vadd.f32 %v1905, %v1978
  %v1980 = vpop.f32.mrb[0].mxu0
  %1981 = vmatprep.mubr.f32.mxu0 0.0
  %1982 = vmatmul.mubr.f32.gmra.mrb[0].mxu0 %v1910
  %v1983 = vpop.f32.mrb[0].mxu0
  %v1984 = vadd.f32 %v1905, %v1983
  %v1985 = vpop.f32.mrb[0].mxu0
  %1986 = vdwg.mxu0
  %v1987 = vmax.f32 %v1979, 0.0
  %v1988 = vmax.f32 %v1984, 0.0
  %s1989 = scalar_lea.vmem %s5, 224
  %v1990 = vld [vmem:[%s1989] sm:$0xff]
  %v1991 = vld [vmem:[%s1989 + $0x8] sm:$0xff]
  %v1992 = vld [vmem:[%s1989 + $0x10] sm:$0xff]
  %v1993 = vld [vmem:[%s1989 + $0x18] sm:$0xff]
  %v1995 = vsel %vm290, %v1987, 0
  %v1998 = vsel %vm290, %v1988, 0
  %2000 = vmatprep.subr.mxu0 0.0
  %2001 = vmatpush1.msra.mxu0 %v1990
  %2002 = vmatprep.subr.mxu0 0.0
  %2003 = vmatpush1.msra.mxu0 %v1991
  %2004 = vmatprep.subr.mxu0 0.0
  %2005 = vmatpush1.msra.mxu0 %v1992
  %2006 = vmatprep.subr.mxu0 0.0
  %2007 = vmatpush1.msra.mxu0 %v1993
  %2008 = vmatprep.subr.mxu0 0.0
  %2009 = vmatpush1.msra.mxu0 0.0
  %2010 = vmatprep.subr.mxu0 0.0
  %2011 = vmatpush1.msra.mxu0 0.0
  %2012 = vmatprep.subr.mxu0 0.0
  %2013 = vmatpush1.msra.mxu0 0.0
  %2014 = vmatprep.subr.mxu0 0.0
  %2015 = vmatpush1.msra.mxu0 0.0
  %2016 = vmatprep.subr.mxu0 0.0
  %2017 = vmatpush1.msra.mxu0 0.0
  %2018 = vmatprep.subr.mxu0 0.0
  %2019 = vmatpush1.msra.mxu0 0.0
  %2020 = vmatprep.subr.mxu0 0.0
  %2021 = vmatpush1.msra.mxu0 0.0
  %2022 = vmatprep.subr.mxu0 0.0
  %2023 = vmatpush1.msra.mxu0 0.0
  %2024 = vmatprep.subr.mxu0 0.0
  %2025 = vmatpush1.msra.mxu0 0.0
  %2026 = vmatprep.subr.mxu0 0.0
  %2027 = vmatpush1.msra.mxu0 0.0
  %2028 = vmatprep.subr.mxu0 0.0
  %2029 = vmatpush1.msra.mxu0 0.0
  %2030 = vmatprep.subr.mxu0 0.0
  %2031 = vmatpush1.msra.mxu0 0.0
  %2032 = vmatprep.subr.mxu0 0.0
  %2033 = vmatpush1.msra.mxu0 0.0
  %2034 = vmatprep.subr.mxu0 0.0
  %2035 = vmatpush1.msra.mxu0 0.0
  %2036 = vmatprep.subr.mxu0 0.0
  %2037 = vmatpush1.msra.mxu0 0.0
  %2038 = vmatprep.subr.mxu0 0.0
  %2039 = vmatpush1.msra.mxu0 0.0
  %2040 = vmatprep.subr.mxu0 0.0
  %2041 = vmatpush1.msra.mxu0 0.0
  %2042 = vmatprep.subr.mxu0 0.0
  %2043 = vmatpush1.msra.mxu0 0.0
  %2044 = vmatprep.subr.mxu0 0.0
  %2045 = vmatpush1.msra.mxu0 0.0
  %2046 = vmatprep.subr.mxu0 0.0
  %2047 = vmatpush1.msra.mxu0 0.0
  %2048 = vmatprep.subr.mxu0 0.0
  %2049 = vmatpush1.msra.mxu0 0.0
  %2050 = vmatprep.subr.mxu0 0.0
  %2051 = vmatpush1.msra.mxu0 0.0
  %2052 = vmatprep.subr.mxu0 0.0
  %2053 = vmatpush1.msra.mxu0 0.0
  %2054 = vmatprep.subr.mxu0 0.0
  %2055 = vmatpush1.msra.mxu0 0.0
  %2056 = vmatprep.subr.mxu0 0.0
  %2057 = vmatpush1.msra.mxu0 0.0
  %2058 = vmatprep.subr.mxu0 0.0
  %2059 = vmatpush1.msra.mxu0 0.0
  %2060 = vmatprep.subr.mxu0 0.0
  %2061 = vmatpush1.msra.mxu0 0.0
  %2062 = vmatprep.subr.mxu0 0.0
  %2063 = vmatpush1.msra.mxu0 0.0
  %2064 = vmatprep.mubr.f32.mxu0 0.0
  %2065 = vmatmul.mubr.f32.gmra.mrb[0].mxu0 %v1995
  %v2066 = vpop.f32.mrb[0].mxu0
  %v2067 = vadd.f32 0.0, %v2066
  %v2068 = vpop.f32.mrb[0].mxu0
  %2069 = vmatprep.mubr.f32.mxu0 0.0
  %2070 = vmatmul.mubr.f32.gmra.mrb[0].mxu0 %v1998
  %v2071 = vpop.f32.mrb[0].mxu0
  %v2072 = vadd.f32 0.0, %v2071
  %v2073 = vpop.f32.mrb[0].mxu0
  %2074 = vdwg.mxu0
  %v2075 = vadd.f32 %v1819, %v2067
  %v2076 = vadd.f32 %v1820, %v2072
  %v2077 = vld [vmem:[%s6] sm:$0x1]
  %v2079 = vlaneseq
  %v2080 = vshrl.u32 %v2079, 7
  %v2081 = vsub.s32 0, %v2080
  %v2082 = vrot.slane %v2077, %v2081
  %v2084 = vadd.f32 %v2075, %v2082
  %v2085 = vadd.f32 %v2076, %v2082
  %vm2086 = vcmask 31744
  %2087 = vst.msk [vmem:[%s7] sm:$0xff] %vm2086, %v2084
  %2088 = vst.msk [vmem:[%s7 + $0x8] sm:$0xff] %vm2086, %v2085
  // Predicated region
  $region30: #{tpu_custom_call.1} parent=0 // pred_check
    _
  $region31: #{tpu_custom_call.1} parent=0 // pred_check_branch
    %2090 = sbr.rel (0) target = $region33
  $region32: #{tpu_custom_call.1} parent=0 // pred_region
    _
  $region33: #{tpu_custom_call.1} parent=0 // pred_fallthru
    _
  // Predicated region
  $region34: #{tpu_custom_call.1} parent=0 // pred_check
    _
  $region35: #{tpu_custom_call.1} parent=0 // pred_check_branch
    %2092 = sbr.rel (0) target = $region37
  $region36: #{tpu_custom_call.1} parent=0 // pred_region
    _
  $region37: #{tpu_custom_call.1} parent=0 // pred_fallthru
    _

</llo_original>
